<compile_context>
chip_gen: v6e
topology: v6e:2x2x1
jax: 0.10.0
libtpu: 0.0.40
codegen_flags: <defaults>
</compile_context>

<pallas_src>
import jax
import jax.numpy as jnp
from jax.experimental import pallas as pl
from jax.experimental.pallas import tpu as pltpu


def _round_up(x: int, m: int) -> int:
    return ((x + m - 1) // m) * m


def _cdiv(a: int, b: int) -> int:
    return -(-a // b)


def net_kernel(xt_ref, w1_ref, b1_ref, w2_ref, b2_ref, w3_ref, b3_ref, o_ref):
    """One batch tile in feature-major layout: x^T (S, tile_b) -> probs^T (A, tile_b)."""
    xt = xt_ref[...]                                                  # (S, tile_b)

    h1 = jnp.dot(w1_ref[...], xt, preferred_element_type=jnp.float32) + b1_ref[...]
    h1 = jnp.maximum(h1, 0.0)                                         # (64, tile_b)

    h2 = jnp.dot(w2_ref[...], h1, preferred_element_type=jnp.float32) + b2_ref[...]
    h2 = jnp.maximum(h2, 0.0)                                         # (64, tile_b)

    logits = (jnp.dot(w3_ref[...], h2, preferred_element_type=jnp.float32)
              + b3_ref[...])                                          # (A, tile_b)

    if logits.shape[0] == 2:
        # Two-class closed form: p1 = sigmoid(l1 - l0) = 0.5*(tanh(d/2)+1).
        # Purely per-lane, one EUP tanh, numerically stable, no reciprocal.
        d = logits[1:2, :] - logits[0:1, :]
        p1 = 0.5 * (jnp.tanh(0.5 * d) + 1.0)
        probs = jnp.concatenate([1.0 - p1, p1], axis=0)
    else:
        # Generic numerically-stable softmax over the (small) action axis.
        m = jnp.max(logits, axis=0, keepdims=True)
        e = jnp.exp(logits - m)
        probs = e / jnp.sum(e, axis=0, keepdims=True)

    o_ref[...] = probs.astype(o_ref.dtype)

    # TODO(synk): fuse categorical action sampling (pltpu.prng_seed +
    # pltpu.prng_random_bits, compare uniform vs p0) and emit int32 actions as
    # a second output so rollout steps never round-trip the probs through HBM.


MAX_TILE_B = 2048  # lane-axis rows per grid step (multiple of 128)


@jax.jit
def net_forward(x, params):
    """x: (B, state_size) float32; params: (in,out) weights + (1,out) biases.

    Returns (B, action_size) softmax probabilities (== PyTorch Net.forward).
    """
    w1, b1, w2, b2, w3, b3 = (
        params["w1"], params["b1"], params["w2"],
        params["b2"], params["w3"], params["b3"],
    )
    B, state_size = x.shape
    action_size = w3.shape[1]

    # Feature-major layout: batch on the lane axis.
    w1t, w2t, w3t = w1.T, w2.T, w3.T          # (64,S), (64,64), (A,64)
    b1t, b2t, b3t = b1.T, b2.T, b3.T          # (64,1), (64,1), (A,1)
    xt = x.T                                  # (S, B)

    # Lane-aligned batch tiling with minimal padding; >=2 equal tiles for
    # larger batches so the "parallel" grid axis can shard across the two
    # TensorCores on v7x (negligible extra per-step cost on 1-TC v5e/v6e).
    b128 = _round_up(max(B, 1), 128)
    n_tiles = _cdiv(b128, MAX_TILE_B)
    if n_tiles == 1 and b128 >= 1024:
        n_tiles = 2
    tile_b = _round_up(_cdiv(b128, n_tiles), 128)
    b_pad = n_tiles * tile_b
    if b_pad != B:
        xt = jnp.pad(xt, ((0, 0), (0, b_pad - B)))

    # Constant block index => weights/biases DMA'd once and VMEM-resident
    # across the whole batch grid; only the x / out tiles stream.
    def pinned(a):
        return pl.BlockSpec(a.shape, lambda i: (0,) * a.ndim)

    out_t = pl.pallas_call(
        net_kernel,
        out_shape=jax.ShapeDtypeStruct((action_size, b_pad), jnp.float32),
        grid=(n_tiles,),
        in_specs=[
            pl.BlockSpec((state_size, tile_b), lambda i: (0, i)),
            pinned(w1t), pinned(b1t),
            pinned(w2t), pinned(b2t),
            pinned(w3t), pinned(b3t),
        ],
        out_specs=pl.BlockSpec((action_size, tile_b), lambda i: (0, i)),
        compiler_params=pltpu.CompilerParams(
            dimension_semantics=("parallel",),
        ),
    )(xt, w1t, b1t, w2t, b2t, w3t, b3t)

    return out_t[:, :B].T


def init_params(key, state_size, action_size, hidden=64):
    """Deterministic synthetic init (PyTorch-Linear-like uniform fan-in scaling)."""
    ks = jax.random.split(key, 6)

    def linear(kw, kb, fan_in, fan_out):
        bound = 1.0 / jnp.sqrt(fan_in)
        w = jax.random.uniform(kw, (fan_in, fan_out), jnp.float32, -bound, bound)
        b = jax.random.uniform(kb, (1, fan_out), jnp.float32, -bound, bound)
        return w, b

    w1, b1 = linear(ks[0], ks[1], state_size, hidden)
    w2, b2 = linear(ks[2], ks[3], hidden, hidden)
    w3, b3 = linear(ks[4], ks[5], hidden, action_size)
    return {"w1": w1, "b1": b1, "w2": w2, "b2": b2, "w3": w3, "b3": b3}


if __name__ == "__main__":
    # CartPole-v1: state_size=4, action_size=2.
    state_size, action_size = 4, 2

    key = jax.random.PRNGKey(0)
    k_params, k_x1, k_x2 = jax.random.split(key, 3)
    params = init_params(k_params, state_size, action_size)

    def ref(x, p):
        h1 = jnp.maximum(x @ p["w1"] + p["b1"], 0.0)
        h2 = jnp.maximum(h1 @ p["w2"] + p["b2"], 0.0)
        return jax.nn.softmax(h2 @ p["w3"] + p["b3"], axis=1)

    # 1) rollout-style batch with an awkward size (1030 -> two 640-wide tiles,
    #    exercises the minimal-padding + 2-tile megacore path).
    xb = jax.random.normal(k_x1, (1030, state_size), dtype=jnp.float32)
    out_b = jax.block_until_ready(net_forward(xb, params))
    assert out_b.shape == (1030, action_size)
    assert jnp.allclose(out_b, ref(xb, params), atol=1e-4, rtol=1e-4)
    assert jnp.allclose(jnp.sum(out_b, axis=1), 1.0, atol=1e-4)

    # 2) tiny batch (exercises the padding / single-tile path).
    xs = jax.random.normal(k_x2, (5, state_size), dtype=jnp.float32)
    out_s = jax.block_until_ready(net_forward(xs, params))
    assert out_s.shape == (5, action_size)
    assert jnp.allclose(out_s, ref(xs, params), atol=1e-4, rtol=1e-4)
    assert jnp.allclose(jnp.sum(out_s, axis=1), 1.0, atol=1e-4)

    print("KERNEL_OK")
</pallas_src>

<mosaic_0001>
module attributes {stable_mosaic.version = 11 : i64} {
  func.func @net_kernel(%arg0: i32, %arg1: memref<4x640xf32, #tpu.memory_space<vmem>>, %arg2: memref<64x4xf32, #tpu.memory_space<vmem>>, %arg3: memref<64x1xf32, #tpu.memory_space<vmem>>, %arg4: memref<64x64xf32, #tpu.memory_space<vmem>>, %arg5: memref<64x1xf32, #tpu.memory_space<vmem>>, %arg6: memref<2x64xf32, #tpu.memory_space<vmem>>, %arg7: memref<2x1xf32, #tpu.memory_space<vmem>>, %arg8: memref<2x640xf32, #tpu.memory_space<vmem>>) attributes {dimension_semantics = [#tpu.dimension_semantics<parallel>], iteration_bounds = array<i64: 2>, scalar_prefetch = 0 : i64, scratch_operands = 0 : i64, tpu.core_type = #tpu.core_type<tc>, window_params = [{transform_indices = @transform_0, window_bounds = array<i64: 4, 640>}, {pipeline_mode = #tpu.pipeline_mode<synchronous>, transform_indices = @transform_1, window_bounds = array<i64: 64, 4>}, {pipeline_mode = #tpu.pipeline_mode<synchronous>, transform_indices = @transform_2, window_bounds = array<i64: 64, 1>}, {pipeline_mode = #tpu.pipeline_mode<synchronous>, transform_indices = @transform_3, window_bounds = array<i64: 64, 64>}, {pipeline_mode = #tpu.pipeline_mode<synchronous>, transform_indices = @transform_4, window_bounds = array<i64: 64, 1>}, {pipeline_mode = #tpu.pipeline_mode<synchronous>, transform_indices = @transform_5, window_bounds = array<i64: 2, 64>}, {pipeline_mode = #tpu.pipeline_mode<synchronous>, transform_indices = @transform_6, window_bounds = array<i64: 2, 1>}, {transform_indices = @transform_7, window_bounds = array<i64: 2, 640>}]} {
    %c0 = arith.constant 0 : index
    %c0_0 = arith.constant 0 : index
    %0 = vector.load %arg1[%c0, %c0_0] : memref<4x640xf32, #tpu.memory_space<vmem>>, vector<4x640xf32>
    %c0_1 = arith.constant 0 : index
    %c0_2 = arith.constant 0 : index
    %1 = vector.load %arg2[%c0_1, %c0_2] : memref<64x4xf32, #tpu.memory_space<vmem>>, vector<64x4xf32>
    %cst = arith.constant dense<0.000000e+00> : vector<64x640xf32>
    %2 = tpu.matmul %1, %0, %cst {dimension_numbers = #tpu.dot_dimension_numbers<[1], [0], [0], [1], [0, 0, 1, 1], [], []>} : vector<64x4xf32>, vector<4x640xf32>, vector<64x640xf32> -> vector<64x640xf32>
    %c0_3 = arith.constant 0 : index
    %c0_4 = arith.constant 0 : index
    %3 = vector.load %arg3[%c0_3, %c0_4] : memref<64x1xf32, #tpu.memory_space<vmem>>, vector<64x1xf32>
    %4 = vector.broadcast %3 : vector<64x1xf32> to vector<64x640xf32>
    %5 = arith.addf %2, %4 : vector<64x640xf32>
    %cst_5 = arith.constant 0.000000e+00 : f32
    %6 = vector.broadcast %cst_5 : f32 to vector<64x640xf32>
    %7 = arith.maximumf %5, %6 : vector<64x640xf32>
    %c0_6 = arith.constant 0 : index
    %c0_7 = arith.constant 0 : index
    %8 = vector.load %arg4[%c0_6, %c0_7] : memref<64x64xf32, #tpu.memory_space<vmem>>, vector<64x64xf32>
    %cst_8 = arith.constant dense<0.000000e+00> : vector<64x640xf32>
    %9 = tpu.matmul %8, %7, %cst_8 {dimension_numbers = #tpu.dot_dimension_numbers<[1], [0], [0], [1], [0, 0, 1, 1], [], []>} : vector<64x64xf32>, vector<64x640xf32>, vector<64x640xf32> -> vector<64x640xf32>
    %c0_9 = arith.constant 0 : index
    %c0_10 = arith.constant 0 : index
    %10 = vector.load %arg5[%c0_9, %c0_10] : memref<64x1xf32, #tpu.memory_space<vmem>>, vector<64x1xf32>
    %11 = vector.broadcast %10 : vector<64x1xf32> to vector<64x640xf32>
    %12 = arith.addf %9, %11 : vector<64x640xf32>
    %cst_11 = arith.constant 0.000000e+00 : f32
    %13 = vector.broadcast %cst_11 : f32 to vector<64x640xf32>
    %14 = arith.maximumf %12, %13 : vector<64x640xf32>
    %c0_12 = arith.constant 0 : index
    %c0_13 = arith.constant 0 : index
    %15 = vector.load %arg6[%c0_12, %c0_13] : memref<2x64xf32, #tpu.memory_space<vmem>>, vector<2x64xf32>
    %cst_14 = arith.constant dense<0.000000e+00> : vector<2x640xf32>
    %16 = tpu.matmul %15, %14, %cst_14 {dimension_numbers = #tpu.dot_dimension_numbers<[1], [0], [0], [1], [0, 0, 1, 1], [], []>} : vector<2x64xf32>, vector<64x640xf32>, vector<2x640xf32> -> vector<2x640xf32>
    %c0_15 = arith.constant 0 : index
    %c0_16 = arith.constant 0 : index
    %17 = vector.load %arg7[%c0_15, %c0_16] : memref<2x1xf32, #tpu.memory_space<vmem>>, vector<2x1xf32>
    %18 = vector.broadcast %17 : vector<2x1xf32> to vector<2x640xf32>
    %19 = arith.addf %16, %18 : vector<2x640xf32>
    %20 = vector.extract_strided_slice %19 {offsets = [1, 0], sizes = [1, 640], strides = [1, 1]} : vector<2x640xf32> to vector<1x640xf32>
    %21 = vector.extract_strided_slice %19 {offsets = [0, 0], sizes = [1, 640], strides = [1, 1]} : vector<2x640xf32> to vector<1x640xf32>
    %22 = arith.subf %20, %21 : vector<1x640xf32>
    %cst_17 = arith.constant 5.000000e-01 : f32
    %23 = vector.broadcast %cst_17 : f32 to vector<1x640xf32>
    %24 = arith.mulf %23, %22 : vector<1x640xf32>
    %25 = math.tanh %24 : vector<1x640xf32>
    %cst_18 = arith.constant 1.000000e+00 : f32
    %26 = vector.broadcast %cst_18 : f32 to vector<1x640xf32>
    %27 = arith.addf %25, %26 : vector<1x640xf32>
    %cst_19 = arith.constant 5.000000e-01 : f32
    %28 = vector.broadcast %cst_19 : f32 to vector<1x640xf32>
    %29 = arith.mulf %28, %27 : vector<1x640xf32>
    %cst_20 = arith.constant 1.000000e+00 : f32
    %30 = vector.broadcast %cst_20 : f32 to vector<1x640xf32>
    %31 = arith.subf %30, %29 : vector<1x640xf32>
    %32 = tpu.concatenate %31, %29 in 0 : vector<1x640xf32>, vector<1x640xf32> -> vector<2x640xf32>
    %c0_21 = arith.constant 0 : index
    %c0_22 = arith.constant 0 : index
    %33 = vector.load %arg8[%c0_21, %c0_22] : memref<2x640xf32, #tpu.memory_space<vmem>>, vector<2x640xf32>
    tpu.vector_store %arg8[%c0_21, %c0_22], %32 {strides = array<i32>} : memref<2x640xf32, #tpu.memory_space<vmem>>, vector<2x640xf32>,
    return
  }
  func.func @transform_0(%arg0: i32) -> (i32, i32) {
    %c0_i32 = arith.constant 0 : i32
    %c0_i32_0 = arith.constant 0 : i32
    return %c0_i32, %arg0 : i32, i32
  }
  func.func @transform_1(%arg0: i32) -> (i32, i32) {
    %c0_i32 = arith.constant 0 : i32
    %c0_i32_0 = arith.constant 0 : i32
    %c0_i32_1 = arith.constant 0 : i32
    return %c0_i32, %c0_i32_0 : i32, i32
  }
  func.func @transform_2(%arg0: i32) -> (i32, i32) {
    %c0_i32 = arith.constant 0 : i32
    %c0_i32_0 = arith.constant 0 : i32
    %c0_i32_1 = arith.constant 0 : i32
    return %c0_i32, %c0_i32_0 : i32, i32
  }
  func.func @transform_3(%arg0: i32) -> (i32, i32) {
    %c0_i32 = arith.constant 0 : i32
    %c0_i32_0 = arith.constant 0 : i32
    %c0_i32_1 = arith.constant 0 : i32
    return %c0_i32, %c0_i32_0 : i32, i32
  }
  func.func @transform_4(%arg0: i32) -> (i32, i32) {
    %c0_i32 = arith.constant 0 : i32
    %c0_i32_0 = arith.constant 0 : i32
    %c0_i32_1 = arith.constant 0 : i32
    return %c0_i32, %c0_i32_0 : i32, i32
  }
  func.func @transform_5(%arg0: i32) -> (i32, i32) {
    %c0_i32 = arith.constant 0 : i32
    %c0_i32_0 = arith.constant 0 : i32
    %c0_i32_1 = arith.constant 0 : i32
    return %c0_i32, %c0_i32_0 : i32, i32
  }
  func.func @transform_6(%arg0: i32) -> (i32, i32) {
    %c0_i32 = arith.constant 0 : i32
    %c0_i32_0 = arith.constant 0 : i32
    %c0_i32_1 = arith.constant 0 : i32
    return %c0_i32, %c0_i32_0 : i32, i32
  }
  func.func @transform_7(%arg0: i32) -> (i32, i32) {
    %c0_i32 = arith.constant 0 : i32
    %c0_i32_0 = arith.constant 0 : i32
    return %c0_i32, %arg0 : i32, i32
  }
}

</mosaic_0001>

<llo_original>
// kernel: net_forward.1
$region0: #{net_forward.1}
  #allocation0 [shape = 'u32[]', space=smem, size = 0x4, offset = 0x4, fixed_abs, tag = 'smem constant byte address 0x4 - core index']
  #allocation1 [shape = 'u32[144,128]{1,0:T(1,128)}', space=vmem, size = 0x12000, scoped, tag = 'internal scratch']
  %s0 = inlined_call_operand.vmem [shape: f32[4,1280], index: 0, kind: input, shape index: {}]
  %s1 = inlined_call_operand.vmem [shape: f32[64,4], index: 1, kind: input, shape index: {}]
  %s2 = inlined_call_operand.vmem [shape: f32[64,1], index: 2, kind: input, shape index: {}]
  %s3 = inlined_call_operand.vmem [shape: f32[64,64], index: 3, kind: input, shape index: {}]
  %s4 = inlined_call_operand.vmem [shape: f32[64,1], index: 4, kind: input, shape index: {}]
  %s5 = inlined_call_operand.vmem [shape: f32[2,64], index: 5, kind: input, shape index: {}]
  %s6 = inlined_call_operand.vmem [shape: f32[2,1], index: 6, kind: input, shape index: {}]
  %s7 = inlined_call_operand.vmem [shape: f32[2,1280], index: 7, kind: output, shape index: {}]
  %s8 = sld [smem:[#allocation0]]
  $region61: #{net_forward.1} parent=0
    _
  %s10 = ssub.s32 1, %s8
  %s11 = scalar_select 0, %s10, %s8
  loop: start=0, step=1, limit=4
  $region2: #{net_forward.1} parent=0 // loop_pre_header
    _
  $region3: #{net_forward.1} parent=0 // loop_header
    %s13 = sphi 0, %s17
    %p14 = scmp.ge.s32.totalorder %s13, 4
    %s23 = sphi 0, %s25
    %s26 = sphi 0, %s23
    %s27 = sphi 0, %s26
    %s43 = sphi 0, %s27
    %s47 = sphi 0, %s47
    %s49 = sphi 0, %s47
    %s50 = sphi 0, %s49
    %s64 = sphi 0, %s50
    %s68 = sphi 0, %s68
    %s70 = sphi 0, %s68
    %s71 = sphi 0, %s70
    %s85 = sphi 0, %s71
    %s89 = sphi 0, %s89
    %s91 = sphi 0, %s89
    %s92 = sphi 0, %s91
    %s106 = sphi 0, %s92
    %s110 = sphi 0, %s110
    %s112 = sphi 0, %s110
    %s113 = sphi 0, %s112
    %s127 = sphi 0, %s113
    %s131 = sphi 0, %s131
    %s133 = sphi 0, %s131
    %s134 = sphi 0, %s133
    %s148 = sphi 0, %s134
    %s152 = sphi 0, %s152
    %s154 = sphi 0, %s152
    %s155 = sphi 0, %s154
    %s169 = sphi 0, %s155
    %s175 = sphi 0, %s177
    %s178 = sphi 0, %s175
    %s179 = sphi 0, %s178
    %s195 = sphi 0, %s179
  $region4: #{net_forward.1} parent=0 // loop_header_branch
    %16 = sbr.rel (%p14) target = $region8
  $region5: #{net_forward.1} parent=0 // loop_body
    %s18 = ssub.s32 %s13, 1
    %s19 = ssub.s32 %s13, 2
    %s20 = sadd.s32 %s13, 1
    %s21 = ssub.s32 %s13, %s20
    %p22 = scmp.eq.s32.totalorder %s21, 0
    %s24 = sadd.s32 %s23, 1
    %s25 = scalar_select %p22, %s23, %s24
    %p28 = pneg %p22
    %p29 = scmp.eq.s32.totalorder %s13, 1
    %p30 = por %p28, %p29
    %p31 = scmp.ne.s32.totalorder %s23, %s26
    %p32 = scmp.eq.s32.totalorder %s13, 0
    %p33 = por %p31, %p32
    %p34 = scmp.ne.s32.totalorder %s23, %s26
    %p35 = scmp.eq.s32.totalorder %s18, 1
    %p36 = por %p34, %p35
    %p37 = scmp.ne.s32.totalorder %s26, %s27
    %p38 = scmp.eq.s32.totalorder %s18, 0
    %p39 = por %p37, %p38
    %p40 = scmp.ne.s32.totalorder %s26, %s27
    %p41 = scmp.eq.s32.totalorder %s19, 1
    %p42 = por %p40, %p41
    %p44 = scmp.ne.s32.totalorder %s27, %s43
    %p45 = scmp.eq.s32.totalorder %s19, 0
    %p46 = por %p44, %p45
    %s48 = sadd.s32 %s47, 1
    %p51 = scmp.eq.s32.totalorder %s13, 1
    %p52 = scmp.ne.s32.totalorder %s47, %s49
    %p53 = scmp.eq.s32.totalorder %s13, 0
    %p54 = por %p52, %p53
    %p55 = scmp.ne.s32.totalorder %s47, %s49
    %p56 = scmp.eq.s32.totalorder %s18, 1
    %p57 = por %p55, %p56
    %p58 = scmp.ne.s32.totalorder %s49, %s50
    %p59 = scmp.eq.s32.totalorder %s18, 0
    %p60 = por %p58, %p59
    %p61 = scmp.ne.s32.totalorder %s49, %s50
    %p62 = scmp.eq.s32.totalorder %s19, 1
    %p63 = por %p61, %p62
    %p65 = scmp.ne.s32.totalorder %s50, %s64
    %p66 = scmp.eq.s32.totalorder %s19, 0
    %p67 = por %p65, %p66
    %s69 = sadd.s32 %s68, 1
    %p72 = scmp.eq.s32.totalorder %s13, 1
    %p73 = scmp.ne.s32.totalorder %s68, %s70
    %p74 = scmp.eq.s32.totalorder %s13, 0
    %p75 = por %p73, %p74
    %p76 = scmp.ne.s32.totalorder %s68, %s70
    %p77 = scmp.eq.s32.totalorder %s18, 1
    %p78 = por %p76, %p77
    %p79 = scmp.ne.s32.totalorder %s70, %s71
    %p80 = scmp.eq.s32.totalorder %s18, 0
    %p81 = por %p79, %p80
    %p82 = scmp.ne.s32.totalorder %s70, %s71
    %p83 = scmp.eq.s32.totalorder %s19, 1
    %p84 = por %p82, %p83
    %p86 = scmp.ne.s32.totalorder %s71, %s85
    %p87 = scmp.eq.s32.totalorder %s19, 0
    %p88 = por %p86, %p87
    %s90 = sadd.s32 %s89, 1
    %p93 = scmp.eq.s32.totalorder %s13, 1
    %p94 = scmp.ne.s32.totalorder %s89, %s91
    %p95 = scmp.eq.s32.totalorder %s13, 0
    %p96 = por %p94, %p95
    %p97 = scmp.ne.s32.totalorder %s89, %s91
    %p98 = scmp.eq.s32.totalorder %s18, 1
    %p99 = por %p97, %p98
    %p100 = scmp.ne.s32.totalorder %s91, %s92
    %p101 = scmp.eq.s32.totalorder %s18, 0
    %p102 = por %p100, %p101
    %p103 = scmp.ne.s32.totalorder %s91, %s92
    %p104 = scmp.eq.s32.totalorder %s19, 1
    %p105 = por %p103, %p104
    %p107 = scmp.ne.s32.totalorder %s92, %s106
    %p108 = scmp.eq.s32.totalorder %s19, 0
    %p109 = por %p107, %p108
    %s111 = sadd.s32 %s110, 1
    %p114 = scmp.eq.s32.totalorder %s13, 1
    %p115 = scmp.ne.s32.totalorder %s110, %s112
    %p116 = scmp.eq.s32.totalorder %s13, 0
    %p117 = por %p115, %p116
    %p118 = scmp.ne.s32.totalorder %s110, %s112
    %p119 = scmp.eq.s32.totalorder %s18, 1
    %p120 = por %p118, %p119
    %p121 = scmp.ne.s32.totalorder %s112, %s113
    %p122 = scmp.eq.s32.totalorder %s18, 0
    %p123 = por %p121, %p122
    %p124 = scmp.ne.s32.totalorder %s112, %s113
    %p125 = scmp.eq.s32.totalorder %s19, 1
    %p126 = por %p124, %p125
    %p128 = scmp.ne.s32.totalorder %s113, %s127
    %p129 = scmp.eq.s32.totalorder %s19, 0
    %p130 = por %p128, %p129
    %s132 = sadd.s32 %s131, 1
    %p135 = scmp.eq.s32.totalorder %s13, 1
    %p136 = scmp.ne.s32.totalorder %s131, %s133
    %p137 = scmp.eq.s32.totalorder %s13, 0
    %p138 = por %p136, %p137
    %p139 = scmp.ne.s32.totalorder %s131, %s133
    %p140 = scmp.eq.s32.totalorder %s18, 1
    %p141 = por %p139, %p140
    %p142 = scmp.ne.s32.totalorder %s133, %s134
    %p143 = scmp.eq.s32.totalorder %s18, 0
    %p144 = por %p142, %p143
    %p145 = scmp.ne.s32.totalorder %s133, %s134
    %p146 = scmp.eq.s32.totalorder %s19, 1
    %p147 = por %p145, %p146
    %p149 = scmp.ne.s32.totalorder %s134, %s148
    %p150 = scmp.eq.s32.totalorder %s19, 0
    %p151 = por %p149, %p150
    %s153 = sadd.s32 %s152, 1
    %p156 = scmp.eq.s32.totalorder %s13, 1
    %p157 = scmp.ne.s32.totalorder %s152, %s154
    %p158 = scmp.eq.s32.totalorder %s13, 0
    %p159 = por %p157, %p158
    %p160 = scmp.ne.s32.totalorder %s152, %s154
    %p161 = scmp.eq.s32.totalorder %s18, 1
    %p162 = por %p160, %p161
    %p163 = scmp.ne.s32.totalorder %s154, %s155
    %p164 = scmp.eq.s32.totalorder %s18, 0
    %p165 = por %p163, %p164
    %p166 = scmp.ne.s32.totalorder %s154, %s155
    %p167 = scmp.eq.s32.totalorder %s19, 1
    %p168 = por %p166, %p167
    %p170 = scmp.ne.s32.totalorder %s155, %s169
    %p171 = scmp.eq.s32.totalorder %s19, 0
    %p172 = por %p170, %p171
    %s173 = ssub.s32 %s13, %s20
    %p174 = scmp.eq.s32.totalorder %s173, 0
    %s176 = sadd.s32 %s175, 1
    %s177 = scalar_select %p174, %s175, %s176
    %p180 = pneg %p174
    %p181 = scmp.eq.s32.totalorder %s13, 1
    %p182 = por %p180, %p181
    %p183 = scmp.ne.s32.totalorder %s175, %s178
    %p184 = scmp.eq.s32.totalorder %s13, 0
    %p185 = por %p183, %p184
    %p186 = scmp.ne.s32.totalorder %s175, %s178
    %p187 = scmp.eq.s32.totalorder %s18, 1
    %p188 = por %p186, %p187
    %p189 = scmp.ne.s32.totalorder %s178, %s179
    %p190 = scmp.eq.s32.totalorder %s18, 0
    %p191 = por %p189, %p190
    %p192 = scmp.ne.s32.totalorder %s178, %s179
    %p193 = scmp.eq.s32.totalorder %s19, 1
    %p194 = por %p192, %p193
    %p196 = scmp.ne.s32.totalorder %s179, %s195
    %p197 = scmp.eq.s32.totalorder %s19, 0
    %p198 = por %p196, %p197
    %p199 = scmp.le.s32.totalorder 1, %s13
    %p200 = scmp.lt.s32.totalorder %s13, 3
    %p201 = pnand %p199, %p200
    %p202 = pneg %p201
    // Predicated region
    $region9: #{net_forward.1} parent=5 // pred_check
      _
    $region10: #{net_forward.1} parent=5 // pred_check_branch
      %204 = sbr.rel (%p201) target = $region12
    $region11: #{net_forward.1} parent=5 // pred_region
      %s205 = ssub.s32 %s13, 1
      // Predicated region
      $region13: #{net_forward.1} parent=11 // pred_check
        %p206 = pneg %p60
      $region14: #{net_forward.1} parent=11 // pred_check_branch
        %208 = sbr.rel (%p206) target = $region16
      $region15: #{net_forward.1} parent=11 // pred_region
        _
      $region16: #{net_forward.1} parent=11 // pred_fallthru
        _
      // Predicated region
      $region17: #{net_forward.1} parent=11 // pred_check
        %p209 = pneg %p81
      $region18: #{net_forward.1} parent=11 // pred_check_branch
        %211 = sbr.rel (%p209) target = $region20
      $region19: #{net_forward.1} parent=11 // pred_region
        _
      $region20: #{net_forward.1} parent=11 // pred_fallthru
        _
      // Predicated region
      $region21: #{net_forward.1} parent=11 // pred_check
        %p212 = pneg %p102
      $region22: #{net_forward.1} parent=11 // pred_check_branch
        %214 = sbr.rel (%p212) target = $region24
      $region23: #{net_forward.1} parent=11 // pred_region
        _
      $region24: #{net_forward.1} parent=11 // pred_fallthru
        _
      // Predicated region
      $region25: #{net_forward.1} parent=11 // pred_check
        %p215 = pneg %p123
      $region26: #{net_forward.1} parent=11 // pred_check_branch
        %217 = sbr.rel (%p215) target = $region28
      $region27: #{net_forward.1} parent=11 // pred_region
        _
      $region28: #{net_forward.1} parent=11 // pred_fallthru
        _
      // Predicated region
      $region29: #{net_forward.1} parent=11 // pred_check
        %p218 = pneg %p144
      $region30: #{net_forward.1} parent=11 // pred_check_branch
        %220 = sbr.rel (%p218) target = $region32
      $region31: #{net_forward.1} parent=11 // pred_region
        _
      $region32: #{net_forward.1} parent=11 // pred_fallthru
        _
      // Predicated region
      $region33: #{net_forward.1} parent=11 // pred_check
        %p221 = pneg %p165
      $region34: #{net_forward.1} parent=11 // pred_check_branch
        %223 = sbr.rel (%p221) target = $region36
      $region35: #{net_forward.1} parent=11 // pred_region
        _
      $region36: #{net_forward.1} parent=11 // pred_fallthru
        _
    $region12: #{net_forward.1} parent=5 // pred_fallthru
      _
    %p224 = scmp.lt.s32.totalorder %s13, 2
    // Predicated region
    $region37: #{net_forward.1} parent=5 // pred_check
      %p225 = pneg %p224
    $region38: #{net_forward.1} parent=5 // pred_check_branch
      %227 = sbr.rel (%p225) target = $region40
    $region39: #{net_forward.1} parent=5 // pred_region
      // Predicated region
      $region41: #{net_forward.1} parent=39 // pred_check
        %p228 = pneg %p33
      $region42: #{net_forward.1} parent=39 // pred_check_branch
        %230 = sbr.rel (%p228) target = $region44
      $region43: #{net_forward.1} parent=39 // pred_region
        %s231 = smul.u32 5, %s13
        %p232 = scmp.lt.s32.totalorder %s231, 9
        %s233 = scalar_select %p232, %s231, 9
        %s234 = smul.addr %s233, 4
        %s235 = scalar_lea.vmem %s0, %s234
        %s236 = smul.u32 5, %s13
      $region44: #{net_forward.1} parent=39 // pred_fallthru
        _
    $region40: #{net_forward.1} parent=5 // pred_fallthru
      _
    %p237 = scmp.le.s32.totalorder 1, %s13
    %p238 = scmp.lt.s32.totalorder %s13, 3
    %p239 = pnand %p237, %p238
    %p240 = pneg %p239
    // Predicated region
    $region45: #{net_forward.1} parent=5 // pred_check
      _
    $region46: #{net_forward.1} parent=5 // pred_check_branch
      %242 = sbr.rel (%p239) target = $region48
    $region47: #{net_forward.1} parent=5 // pred_region
      %s243 = ssub.s32 %s13, 1
      %s244 = smul.u32 5, %s18
      %p245 = scmp.lt.s32.totalorder %s244, 9
      %s246 = scalar_select %p245, %s244, 9
      %s247 = smul.addr %s246, 4
      %s248 = scalar_lea.vmem %s0, %s247
      %p249 = pneg %p39
      %p250 = pneg %p36
      %p251 = pneg %p60
      %p252 = pneg %p57
      %p253 = pneg %p81
      %p254 = pneg %p78
      %p255 = pneg %p102
      %p256 = pneg %p99
      %p257 = pneg %p123
      %p258 = pneg %p120
      %p259 = pneg %p144
      %p260 = pneg %p141
      %p261 = pneg %p165
      %p262 = pneg %p162
      %p263 = pneg %p191
      %p264 = pneg %p188
      %s265 = smul.u32 5, %s18
      %p266 = scmp.lt.s32.totalorder %s265, 9
      %s267 = scalar_select %p266, %s265, 9
      %s268 = smul.addr %s267, 2
      %s269 = scalar_lea.vmem %s7, %s268
      %s270 = smul.u32 5, %s18
      %p271 = scmp.lt.s32.totalorder %s270, 9
      %s272 = scalar_select %p271, %s270, 9
      %s273 = smul.addr %s272, 4
      %s274 = scalar_lea.vmem %s0, %s273
      %s275 = smul.u32 5, %s18
      %s276 = smul.u32 5, %s18
      %p277 = scmp.lt.s32.totalorder %s276, 9
      %s278 = scalar_select %p277, %s276, 9
      %s279 = smul.addr %s278, 2
      %s280 = scalar_lea.vmem %s7, %s279
      %s281 = smul.u32 5, %s18
      %v282 = vld [vmem:[%s274] sm:$0xff]
      %v283 = vld [vmem:[%s274 + $0x8] sm:$0xff]
      %v284 = vld [vmem:[%s274 + $0x10] sm:$0xf]
      %v285 = vld [vmem:[%s1] sm:$0xff]
      %v286 = vld [vmem:[%s1 + $0x8] sm:$0xff]
      %v287 = vld [vmem:[%s1 + $0x10] sm:$0xff]
      %v288 = vld [vmem:[%s1 + $0x18] sm:$0xff]
      %v289 = vld [vmem:[%s1 + $0x20] sm:$0xff]
      %v290 = vld [vmem:[%s1 + $0x28] sm:$0xff]
      %v291 = vld [vmem:[%s1 + $0x30] sm:$0xff]
      %v292 = vld [vmem:[%s1 + $0x38] sm:$0xff]
      %v293 = vld [vmem:[%s2] sm:$0xff]
      %v294 = vld [vmem:[%s2 + $0x8] sm:$0xff]
      %v295 = vld [vmem:[%s2 + $0x10] sm:$0xff]
      %v296 = vld [vmem:[%s2 + $0x18] sm:$0xff]
      %v297 = vld [vmem:[%s2 + $0x20] sm:$0xff]
      %v298 = vld [vmem:[%s2 + $0x28] sm:$0xff]
      %v299 = vld [vmem:[%s2 + $0x30] sm:$0xff]
      %v300 = vld [vmem:[%s2 + $0x38] sm:$0xff]
      %302 = vset.pattern.permute.xlu0 0
      %303 = vperm.xlu0 %302, %v293
      %v304 = vpop.permute.xlu0 %303
      %307 = vset.pattern.permute.xlu0 0
      %308 = vperm.xlu0 %307, %v294
      %v309 = vpop.permute.xlu0 %308
      %312 = vset.pattern.permute.xlu0 0
      %313 = vperm.xlu0 %312, %v295
      %v314 = vpop.permute.xlu0 %313
      %317 = vset.pattern.permute.xlu0 0
      %318 = vperm.xlu0 %317, %v296
      %v319 = vpop.permute.xlu0 %318
      %322 = vset.pattern.permute.xlu0 0
      %323 = vperm.xlu0 %322, %v297
      %v324 = vpop.permute.xlu0 %323
      %327 = vset.pattern.permute.xlu0 0
      %328 = vperm.xlu0 %327, %v298
      %v329 = vpop.permute.xlu0 %328
      %332 = vset.pattern.permute.xlu0 0
      %333 = vperm.xlu0 %332, %v299
      %v334 = vpop.permute.xlu0 %333
      %337 = vset.pattern.permute.xlu0 0
      %338 = vperm.xlu0 %337, %v300
      %v339 = vpop.permute.xlu0 %338
      %v344 = vcombine.high %v282, %v282
      %v345 = vcombine.high %v283, %v283
      %vm346 = vcmask 31744
      %v348 = vsel %vm346, %v285, 0
      %v351 = vsel %vm346, %v286, 0
      %v354 = vsel %vm346, %v287, 0
      %v357 = vsel %vm346, %v288, 0
      %v360 = vsel %vm346, %v289, 0
      %v363 = vsel %vm346, %v290, 0
      %v366 = vsel %vm346, %v291, 0
      %v369 = vsel %vm346, %v292, 0
      %vm371 = vcmask 1043456
      %v372 = vsel %vm371, %v282, 0
      %v374 = vsel %vm371, %v344, 0
      %v376 = vsel %vm371, %v283, 0
      %v378 = vsel %vm371, %v345, 0
      %v380 = vsel %vm371, %v284, 0
      %382 = vmatprep.subr.mxu0 0.0
      %383 = vmatpush1.msra.mxu0 0.0
      %384 = vmatprep.subr.mxu0 0.0
      %385 = vmatpush1.msra.mxu0 0.0
      %386 = vmatprep.subr.mxu0 0.0
      %387 = vmatpush1.msra.mxu0 0.0
      %388 = vmatprep.subr.mxu0 0.0
      %389 = vmatpush1.msra.mxu0 0.0
      %390 = vmatprep.subr.mxu0 0.0
      %391 = vmatpush1.msra.mxu0 0.0
      %392 = vmatprep.subr.mxu0 0.0
      %393 = vmatpush1.msra.mxu0 0.0
      %394 = vmatprep.subr.mxu0 0.0
      %395 = vmatpush1.msra.mxu0 0.0
      %396 = vmatprep.subr.mxu0 0.0
      %397 = vmatpush1.msra.mxu0 0.0
      %398 = vmatprep.subr.mxu0 0.0
      %399 = vmatpush1.msra.mxu0 0.0
      %400 = vmatprep.subr.mxu0 0.0
      %401 = vmatpush1.msra.mxu0 0.0
      %402 = vmatprep.subr.mxu0 0.0
      %403 = vmatpush1.msra.mxu0 0.0
      %404 = vmatprep.subr.mxu0 0.0
      %405 = vmatpush1.msra.mxu0 0.0
      %406 = vmatprep.subr.mxu0 0.0
      %407 = vmatpush1.msra.mxu0 0.0
      %408 = vmatprep.subr.mxu0 0.0
      %409 = vmatpush1.msra.mxu0 0.0
      %410 = vmatprep.subr.mxu0 0.0
      %411 = vmatpush1.msra.mxu0 0.0
      %412 = vmatprep.subr.mxu0 %v374
      %413 = vmatpush1.msra.mxu0 %v372
      %414 = vmatprep.subr.mxu0 0.0
      %415 = vmatpush2.msra.mxu0 0.0
      %416 = vmatprep.subr.mxu0 0.0
      %417 = vmatpush2.msra.mxu0 0.0
      %418 = vmatprep.subr.mxu0 0.0
      %419 = vmatpush2.msra.mxu0 0.0
      %420 = vmatprep.subr.mxu0 0.0
      %421 = vmatpush2.msra.mxu0 0.0
      %422 = vmatprep.subr.mxu0 0.0
      %423 = vmatpush2.msra.mxu0 0.0
      %424 = vmatprep.subr.mxu0 0.0
      %425 = vmatpush2.msra.mxu0 0.0
      %426 = vmatprep.subr.mxu0 0.0
      %427 = vmatpush2.msra.mxu0 0.0
      %428 = vmatprep.subr.mxu0 0.0
      %429 = vmatpush2.msra.mxu0 0.0
      %430 = vmatprep.subr.mxu0 0.0
      %431 = vmatpush2.msra.mxu0 0.0
      %432 = vmatprep.subr.mxu0 0.0
      %433 = vmatpush2.msra.mxu0 0.0
      %434 = vmatprep.subr.mxu0 0.0
      %435 = vmatpush2.msra.mxu0 0.0
      %436 = vmatprep.subr.mxu0 0.0
      %437 = vmatpush2.msra.mxu0 0.0
      %438 = vmatprep.subr.mxu0 0.0
      %439 = vmatpush2.msra.mxu0 0.0
      %440 = vmatprep.subr.mxu0 0.0
      %441 = vmatpush2.msra.mxu0 0.0
      %442 = vmatprep.subr.mxu0 0.0
      %443 = vmatpush2.msra.mxu0 0.0
      %444 = vmatprep.subr.mxu0 0.0
      %445 = vmatpush2.msra.mxu0 0.0
      %446 = vmatprep.mubr.f32.mxu0 0.0
      %447 = vmatmul.mubr.f32.gmra.mxu0 %v348
      %v448 = vpop.f32.mrf.mxu0
      %v449 = vadd.f32 %v304, %v448
      %v450 = vpop.f32.mrf.mxu0
      %v451 = vadd.f32 %v304, %v450
      %452 = vmatprep.mubr.f32.mxu0 0.0
      %453 = vmatmul.mubr.f32.gmra.mxu0 %v351
      %v454 = vpop.f32.mrf.mxu0
      %v455 = vadd.f32 %v309, %v454
      %v456 = vpop.f32.mrf.mxu0
      %v457 = vadd.f32 %v309, %v456
      %458 = vmatprep.mubr.f32.mxu0 0.0
      %459 = vmatmul.mubr.f32.gmra.mxu0 %v354
      %v460 = vpop.f32.mrf.mxu0
      %v461 = vadd.f32 %v314, %v460
      %v462 = vpop.f32.mrf.mxu0
      %v463 = vadd.f32 %v314, %v462
      %464 = vmatprep.mubr.f32.mxu0 0.0
      %465 = vmatmul.mubr.f32.gmra.mxu0 %v357
      %v466 = vpop.f32.mrf.mxu0
      %v467 = vadd.f32 %v319, %v466
      %v468 = vpop.f32.mrf.mxu0
      %v469 = vadd.f32 %v319, %v468
      %470 = vmatprep.mubr.f32.mxu0 0.0
      %471 = vmatmul.mubr.f32.gmra.mxu0 %v360
      %v472 = vpop.f32.mrf.mxu0
      %v473 = vadd.f32 %v324, %v472
      %v474 = vpop.f32.mrf.mxu0
      %v475 = vadd.f32 %v324, %v474
      %476 = vmatprep.mubr.f32.mxu0 0.0
      %477 = vmatmul.mubr.f32.gmra.mxu0 %v363
      %v478 = vpop.f32.mrf.mxu0
      %v479 = vadd.f32 %v329, %v478
      %v480 = vpop.f32.mrf.mxu0
      %v481 = vadd.f32 %v329, %v480
      %482 = vmatprep.mubr.f32.mxu0 0.0
      %483 = vmatmul.mubr.f32.gmra.mxu0 %v366
      %v484 = vpop.f32.mrf.mxu0
      %v485 = vadd.f32 %v334, %v484
      %v486 = vpop.f32.mrf.mxu0
      %v487 = vadd.f32 %v334, %v486
      %488 = vmatprep.mubr.f32.mxu0 0.0
      %489 = vmatmul.mubr.f32.gmra.mxu0 %v369
      %v490 = vpop.f32.mrf.mxu0
      %v491 = vadd.f32 %v339, %v490
      %v492 = vpop.f32.mrf.mxu0
      %v493 = vadd.f32 %v339, %v492
      %494 = vdwg.mxu0
      %495 = vmatprep.subr.mxu0 0.0
      %496 = vmatpush1.msra.mxu0 0.0
      %497 = vmatprep.subr.mxu0 0.0
      %498 = vmatpush1.msra.mxu0 0.0
      %499 = vmatprep.subr.mxu0 0.0
      %500 = vmatpush1.msra.mxu0 0.0
      %501 = vmatprep.subr.mxu0 0.0
      %502 = vmatpush1.msra.mxu0 0.0
      %503 = vmatprep.subr.mxu0 0.0
      %504 = vmatpush1.msra.mxu0 0.0
      %505 = vmatprep.subr.mxu0 0.0
      %506 = vmatpush1.msra.mxu0 0.0
      %507 = vmatprep.subr.mxu0 0.0
      %508 = vmatpush1.msra.mxu0 0.0
      %509 = vmatprep.subr.mxu0 0.0
      %510 = vmatpush1.msra.mxu0 0.0
      %511 = vmatprep.subr.mxu0 0.0
      %512 = vmatpush1.msra.mxu0 0.0
      %513 = vmatprep.subr.mxu0 0.0
      %514 = vmatpush1.msra.mxu0 0.0
      %515 = vmatprep.subr.mxu0 0.0
      %516 = vmatpush1.msra.mxu0 0.0
      %517 = vmatprep.subr.mxu0 0.0
      %518 = vmatpush1.msra.mxu0 0.0
      %519 = vmatprep.subr.mxu0 0.0
      %520 = vmatpush1.msra.mxu0 0.0
      %521 = vmatprep.subr.mxu0 0.0
      %522 = vmatpush1.msra.mxu0 0.0
      %523 = vmatprep.subr.mxu0 0.0
      %524 = vmatpush1.msra.mxu0 0.0
      %525 = vmatprep.subr.mxu0 %v378
      %526 = vmatpush1.msra.mxu0 %v376
      %527 = vmatprep.subr.mxu0 0.0
      %528 = vmatpush2.msra.mxu0 0.0
      %529 = vmatprep.subr.mxu0 0.0
      %530 = vmatpush2.msra.mxu0 0.0
      %531 = vmatprep.subr.mxu0 0.0
      %532 = vmatpush2.msra.mxu0 0.0
      %533 = vmatprep.subr.mxu0 0.0
      %534 = vmatpush2.msra.mxu0 0.0
      %535 = vmatprep.subr.mxu0 0.0
      %536 = vmatpush2.msra.mxu0 0.0
      %537 = vmatprep.subr.mxu0 0.0
      %538 = vmatpush2.msra.mxu0 0.0
      %539 = vmatprep.subr.mxu0 0.0
      %540 = vmatpush2.msra.mxu0 0.0
      %541 = vmatprep.subr.mxu0 0.0
      %542 = vmatpush2.msra.mxu0 0.0
      %543 = vmatprep.subr.mxu0 0.0
      %544 = vmatpush2.msra.mxu0 0.0
      %545 = vmatprep.subr.mxu0 0.0
      %546 = vmatpush2.msra.mxu0 0.0
      %547 = vmatprep.subr.mxu0 0.0
      %548 = vmatpush2.msra.mxu0 0.0
      %549 = vmatprep.subr.mxu0 0.0
      %550 = vmatpush2.msra.mxu0 0.0
      %551 = vmatprep.subr.mxu0 0.0
      %552 = vmatpush2.msra.mxu0 0.0
      %553 = vmatprep.subr.mxu0 0.0
      %554 = vmatpush2.msra.mxu0 0.0
      %555 = vmatprep.subr.mxu0 0.0
      %556 = vmatpush2.msra.mxu0 0.0
      %557 = vmatprep.subr.mxu0 0.0
      %558 = vmatpush2.msra.mxu0 0.0
      %559 = vmatprep.mubr.f32.mxu0 0.0
      %560 = vmatmul.mubr.f32.gmra.mxu0 %v348
      %v561 = vpop.f32.mrf.mxu0
      %v562 = vadd.f32 %v304, %v561
      %v563 = vpop.f32.mrf.mxu0
      %v564 = vadd.f32 %v304, %v563
      %565 = vmatprep.mubr.f32.mxu0 0.0
      %566 = vmatmul.mubr.f32.gmra.mxu0 %v351
      %v567 = vpop.f32.mrf.mxu0
      %v568 = vadd.f32 %v309, %v567
      %v569 = vpop.f32.mrf.mxu0
      %v570 = vadd.f32 %v309, %v569
      %571 = vmatprep.mubr.f32.mxu0 0.0
      %572 = vmatmul.mubr.f32.gmra.mxu0 %v354
      %v573 = vpop.f32.mrf.mxu0
      %v574 = vadd.f32 %v314, %v573
      %v575 = vpop.f32.mrf.mxu0
      %v576 = vadd.f32 %v314, %v575
      %577 = vmatprep.mubr.f32.mxu0 0.0
      %578 = vmatmul.mubr.f32.gmra.mxu0 %v357
      %v579 = vpop.f32.mrf.mxu0
      %v580 = vadd.f32 %v319, %v579
      %v581 = vpop.f32.mrf.mxu0
      %v582 = vadd.f32 %v319, %v581
      %583 = vmatprep.mubr.f32.mxu0 0.0
      %584 = vmatmul.mubr.f32.gmra.mxu0 %v360
      %v585 = vpop.f32.mrf.mxu0
      %v586 = vadd.f32 %v324, %v585
      %v587 = vpop.f32.mrf.mxu0
      %v588 = vadd.f32 %v324, %v587
      %589 = vmatprep.mubr.f32.mxu0 0.0
      %590 = vmatmul.mubr.f32.gmra.mxu0 %v363
      %v591 = vpop.f32.mrf.mxu0
      %v592 = vadd.f32 %v329, %v591
      %v593 = vpop.f32.mrf.mxu0
      %v594 = vadd.f32 %v329, %v593
      %595 = vmatprep.mubr.f32.mxu0 0.0
      %596 = vmatmul.mubr.f32.gmra.mxu0 %v366
      %v597 = vpop.f32.mrf.mxu0
      %v598 = vadd.f32 %v334, %v597
      %v599 = vpop.f32.mrf.mxu0
      %v600 = vadd.f32 %v334, %v599
      %601 = vmatprep.mubr.f32.mxu0 0.0
      %602 = vmatmul.mubr.f32.gmra.mxu0 %v369
      %v603 = vpop.f32.mrf.mxu0
      %v604 = vadd.f32 %v339, %v603
      %v605 = vpop.f32.mrf.mxu0
      %v606 = vadd.f32 %v339, %v605
      %607 = vdwg.mxu0
      %608 = vmatprep.subr.mxu0 0.0
      %609 = vmatpush1.msra.mxu0 0.0
      %610 = vmatprep.subr.mxu0 0.0
      %611 = vmatpush1.msra.mxu0 0.0
      %612 = vmatprep.subr.mxu0 0.0
      %613 = vmatpush1.msra.mxu0 0.0
      %614 = vmatprep.subr.mxu0 0.0
      %615 = vmatpush1.msra.mxu0 0.0
      %616 = vmatprep.subr.mxu0 0.0
      %617 = vmatpush1.msra.mxu0 0.0
      %618 = vmatprep.subr.mxu0 0.0
      %619 = vmatpush1.msra.mxu0 0.0
      %620 = vmatprep.subr.mxu0 0.0
      %621 = vmatpush1.msra.mxu0 0.0
      %622 = vmatprep.subr.mxu0 0.0
      %623 = vmatpush1.msra.mxu0 0.0
      %624 = vmatprep.subr.mxu0 0.0
      %625 = vmatpush1.msra.mxu0 0.0
      %626 = vmatprep.subr.mxu0 0.0
      %627 = vmatpush1.msra.mxu0 0.0
      %628 = vmatprep.subr.mxu0 0.0
      %629 = vmatpush1.msra.mxu0 0.0
      %630 = vmatprep.subr.mxu0 0.0
      %631 = vmatpush1.msra.mxu0 0.0
      %632 = vmatprep.subr.mxu0 0.0
      %633 = vmatpush1.msra.mxu0 0.0
      %634 = vmatprep.subr.mxu0 0.0
      %635 = vmatpush1.msra.mxu0 0.0
      %636 = vmatprep.subr.mxu0 0.0
      %637 = vmatpush1.msra.mxu0 0.0
      %638 = vmatprep.subr.mxu0 0.0
      %639 = vmatpush1.msra.mxu0 %v380
      %640 = vmatprep.subr.mxu0 0.0
      %641 = vmatpush2.msra.mxu0 0.0
      %642 = vmatprep.subr.mxu0 0.0
      %643 = vmatpush2.msra.mxu0 0.0
      %644 = vmatprep.subr.mxu0 0.0
      %645 = vmatpush2.msra.mxu0 0.0
      %646 = vmatprep.subr.mxu0 0.0
      %647 = vmatpush2.msra.mxu0 0.0
      %648 = vmatprep.subr.mxu0 0.0
      %649 = vmatpush2.msra.mxu0 0.0
      %650 = vmatprep.subr.mxu0 0.0
      %651 = vmatpush2.msra.mxu0 0.0
      %652 = vmatprep.subr.mxu0 0.0
      %653 = vmatpush2.msra.mxu0 0.0
      %654 = vmatprep.subr.mxu0 0.0
      %655 = vmatpush2.msra.mxu0 0.0
      %656 = vmatprep.subr.mxu0 0.0
      %657 = vmatpush2.msra.mxu0 0.0
      %658 = vmatprep.subr.mxu0 0.0
      %659 = vmatpush2.msra.mxu0 0.0
      %660 = vmatprep.subr.mxu0 0.0
      %661 = vmatpush2.msra.mxu0 0.0
      %662 = vmatprep.subr.mxu0 0.0
      %663 = vmatpush2.msra.mxu0 0.0
      %664 = vmatprep.subr.mxu0 0.0
      %665 = vmatpush2.msra.mxu0 0.0
      %666 = vmatprep.subr.mxu0 0.0
      %667 = vmatpush2.msra.mxu0 0.0
      %668 = vmatprep.subr.mxu0 0.0
      %669 = vmatpush2.msra.mxu0 0.0
      %670 = vmatprep.subr.mxu0 0.0
      %671 = vmatpush2.msra.mxu0 0.0
      %672 = vmatprep.mubr.f32.mxu0 0.0
      %673 = vmatmul.mubr.f32.gmra.mxu0 %v348
      %v674 = vpop.f32.mrf.mxu0
      %v675 = vadd.f32 %v304, %v674
      %v676 = vpop.f32.mrf.mxu0
      %677 = vmatprep.mubr.f32.mxu0 0.0
      %678 = vmatmul.mubr.f32.gmra.mxu0 %v351
      %v679 = vpop.f32.mrf.mxu0
      %v680 = vadd.f32 %v309, %v679
      %v681 = vpop.f32.mrf.mxu0
      %682 = vmatprep.mubr.f32.mxu0 0.0
      %683 = vmatmul.mubr.f32.gmra.mxu0 %v354
      %v684 = vpop.f32.mrf.mxu0
      %v685 = vadd.f32 %v314, %v684
      %v686 = vpop.f32.mrf.mxu0
      %687 = vmatprep.mubr.f32.mxu0 0.0
      %688 = vmatmul.mubr.f32.gmra.mxu0 %v357
      %v689 = vpop.f32.mrf.mxu0
      %v690 = vadd.f32 %v319, %v689
      %v691 = vpop.f32.mrf.mxu0
      %692 = vmatprep.mubr.f32.mxu0 0.0
      %693 = vmatmul.mubr.f32.gmra.mxu0 %v360
      %v694 = vpop.f32.mrf.mxu0
      %v695 = vadd.f32 %v324, %v694
      %v696 = vpop.f32.mrf.mxu0
      %697 = vmatprep.mubr.f32.mxu0 0.0
      %698 = vmatmul.mubr.f32.gmra.mxu0 %v363
      %v699 = vpop.f32.mrf.mxu0
      %v700 = vadd.f32 %v329, %v699
      %v701 = vpop.f32.mrf.mxu0
      %702 = vmatprep.mubr.f32.mxu0 0.0
      %703 = vmatmul.mubr.f32.gmra.mxu0 %v366
      %v704 = vpop.f32.mrf.mxu0
      %v705 = vadd.f32 %v334, %v704
      %v706 = vpop.f32.mrf.mxu0
      %707 = vmatprep.mubr.f32.mxu0 0.0
      %708 = vmatmul.mubr.f32.gmra.mxu0 %v369
      %v709 = vpop.f32.mrf.mxu0
      %v710 = vadd.f32 %v339, %v709
      %v711 = vpop.f32.mrf.mxu0
      %712 = vdwg.mxu0
      %v713 = vmax.f32 %v449, 0.0
      %v714 = vmax.f32 %v451, 0.0
      %v715 = vmax.f32 %v562, 0.0
      %v716 = vmax.f32 %v564, 0.0
      %v717 = vmax.f32 %v675, 0.0
      %v718 = vmax.f32 %v455, 0.0
      %v719 = vmax.f32 %v457, 0.0
      %v720 = vmax.f32 %v568, 0.0
      %v721 = vmax.f32 %v570, 0.0
      %v722 = vmax.f32 %v680, 0.0
      %v723 = vmax.f32 %v461, 0.0
      %v724 = vmax.f32 %v463, 0.0
      %v725 = vmax.f32 %v574, 0.0
      %v726 = vmax.f32 %v576, 0.0
      %v727 = vmax.f32 %v685, 0.0
      %v728 = vmax.f32 %v467, 0.0
      %v729 = vmax.f32 %v469, 0.0
      %v730 = vmax.f32 %v580, 0.0
      %v731 = vmax.f32 %v582, 0.0
      %v732 = vmax.f32 %v690, 0.0
      %v733 = vmax.f32 %v473, 0.0
      %v734 = vmax.f32 %v475, 0.0
      %v735 = vmax.f32 %v586, 0.0
      %v736 = vmax.f32 %v588, 0.0
      %v737 = vmax.f32 %v695, 0.0
      %v738 = vmax.f32 %v479, 0.0
      %v739 = vmax.f32 %v481, 0.0
      %v740 = vmax.f32 %v592, 0.0
      %v741 = vmax.f32 %v594, 0.0
      %v742 = vmax.f32 %v700, 0.0
      %v743 = vmax.f32 %v485, 0.0
      %v744 = vmax.f32 %v487, 0.0
      %v745 = vmax.f32 %v598, 0.0
      %v746 = vmax.f32 %v600, 0.0
      %v747 = vmax.f32 %v705, 0.0
      %v748 = vmax.f32 %v491, 0.0
      %v749 = vmax.f32 %v493, 0.0
      %v750 = vmax.f32 %v604, 0.0
      %v751 = vmax.f32 %v606, 0.0
      %v752 = vmax.f32 %v710, 0.0
      %v753 = vld [vmem:[%s3] sm:$0xff]
      %v754 = vld [vmem:[%s3 + $0x8] sm:$0xff]
      %v755 = vld [vmem:[%s3 + $0x10] sm:$0xff]
      %v756 = vld [vmem:[%s3 + $0x18] sm:$0xff]
      %v757 = vld [vmem:[%s3 + $0x20] sm:$0xff]
      %v758 = vld [vmem:[%s3 + $0x28] sm:$0xff]
      %v759 = vld [vmem:[%s3 + $0x30] sm:$0xff]
      %v760 = vld [vmem:[%s3 + $0x38] sm:$0xff]
      %v761 = vld [vmem:[%s4] sm:$0xff]
      %v762 = vld [vmem:[%s4 + $0x8] sm:$0xff]
      %v763 = vld [vmem:[%s4 + $0x10] sm:$0xff]
      %v764 = vld [vmem:[%s4 + $0x18] sm:$0xff]
      %v765 = vld [vmem:[%s4 + $0x20] sm:$0xff]
      %v766 = vld [vmem:[%s4 + $0x28] sm:$0xff]
      %v767 = vld [vmem:[%s4 + $0x30] sm:$0xff]
      %v768 = vld [vmem:[%s4 + $0x38] sm:$0xff]
      %770 = vset.pattern.permute.xlu0 0
      %771 = vperm.xlu0 %770, %v761
      %v772 = vpop.permute.xlu0 %771
      %775 = vset.pattern.permute.xlu0 0
      %776 = vperm.xlu0 %775, %v762
      %v777 = vpop.permute.xlu0 %776
      %780 = vset.pattern.permute.xlu0 0
      %781 = vperm.xlu0 %780, %v763
      %v782 = vpop.permute.xlu0 %781
      %785 = vset.pattern.permute.xlu0 0
      %786 = vperm.xlu0 %785, %v764
      %v787 = vpop.permute.xlu0 %786
      %790 = vset.pattern.permute.xlu0 0
      %791 = vperm.xlu0 %790, %v765
      %v792 = vpop.permute.xlu0 %791
      %795 = vset.pattern.permute.xlu0 0
      %796 = vperm.xlu0 %795, %v766
      %v797 = vpop.permute.xlu0 %796
      %800 = vset.pattern.permute.xlu0 0
      %801 = vperm.xlu0 %800, %v767
      %v802 = vpop.permute.xlu0 %801
      %805 = vset.pattern.permute.xlu0 0
      %806 = vperm.xlu0 %805, %v768
      %v807 = vpop.permute.xlu0 %806
      %vm809 = vcmask 523264
      %v811 = vsel %vm809, %v753, 0
      %v814 = vsel %vm809, %v754, 0
      %v817 = vsel %vm809, %v755, 0
      %v820 = vsel %vm809, %v756, 0
      %v823 = vsel %vm809, %v757, 0
      %v826 = vsel %vm809, %v758, 0
      %v829 = vsel %vm809, %v759, 0
      %v832 = vsel %vm809, %v760, 0
      %834 = vmatprep.subr.mxu0 0.0
      %835 = vmatpush1.msra.mxu0 0.0
      %836 = vmatprep.subr.mxu0 0.0
      %837 = vmatpush1.msra.mxu0 0.0
      %838 = vmatprep.subr.mxu0 0.0
      %839 = vmatpush1.msra.mxu0 0.0
      %840 = vmatprep.subr.mxu0 0.0
      %841 = vmatpush1.msra.mxu0 0.0
      %842 = vmatprep.subr.mxu0 0.0
      %843 = vmatpush1.msra.mxu0 0.0
      %844 = vmatprep.subr.mxu0 0.0
      %845 = vmatpush1.msra.mxu0 0.0
      %846 = vmatprep.subr.mxu0 0.0
      %847 = vmatpush1.msra.mxu0 0.0
      %848 = vmatprep.subr.mxu0 0.0
      %849 = vmatpush1.msra.mxu0 0.0
      %850 = vmatprep.subr.mxu0 %v749
      %851 = vmatpush1.msra.mxu0 %v748
      %852 = vmatprep.subr.mxu0 %v744
      %853 = vmatpush1.msra.mxu0 %v743
      %854 = vmatprep.subr.mxu0 %v739
      %855 = vmatpush1.msra.mxu0 %v738
      %856 = vmatprep.subr.mxu0 %v734
      %857 = vmatpush1.msra.mxu0 %v733
      %858 = vmatprep.subr.mxu0 %v729
      %859 = vmatpush1.msra.mxu0 %v728
      %860 = vmatprep.subr.mxu0 %v724
      %861 = vmatpush1.msra.mxu0 %v723
      %862 = vmatprep.subr.mxu0 %v719
      %863 = vmatpush1.msra.mxu0 %v718
      %864 = vmatprep.subr.mxu0 %v714
      %865 = vmatpush1.msra.mxu0 %v713
      %866 = vmatprep.subr.mxu0 0.0
      %867 = vmatpush2.msra.mxu0 0.0
      %868 = vmatprep.subr.mxu0 0.0
      %869 = vmatpush2.msra.mxu0 0.0
      %870 = vmatprep.subr.mxu0 0.0
      %871 = vmatpush2.msra.mxu0 0.0
      %872 = vmatprep.subr.mxu0 0.0
      %873 = vmatpush2.msra.mxu0 0.0
      %874 = vmatprep.subr.mxu0 0.0
      %875 = vmatpush2.msra.mxu0 0.0
      %876 = vmatprep.subr.mxu0 0.0
      %877 = vmatpush2.msra.mxu0 0.0
      %878 = vmatprep.subr.mxu0 0.0
      %879 = vmatpush2.msra.mxu0 0.0
      %880 = vmatprep.subr.mxu0 0.0
      %881 = vmatpush2.msra.mxu0 0.0
      %882 = vmatprep.subr.mxu0 0.0
      %883 = vmatpush2.msra.mxu0 0.0
      %884 = vmatprep.subr.mxu0 0.0
      %885 = vmatpush2.msra.mxu0 0.0
      %886 = vmatprep.subr.mxu0 0.0
      %887 = vmatpush2.msra.mxu0 0.0
      %888 = vmatprep.subr.mxu0 0.0
      %889 = vmatpush2.msra.mxu0 0.0
      %890 = vmatprep.subr.mxu0 0.0
      %891 = vmatpush2.msra.mxu0 0.0
      %892 = vmatprep.subr.mxu0 0.0
      %893 = vmatpush2.msra.mxu0 0.0
      %894 = vmatprep.subr.mxu0 0.0
      %895 = vmatpush2.msra.mxu0 0.0
      %896 = vmatprep.subr.mxu0 0.0
      %897 = vmatpush2.msra.mxu0 0.0
      %898 = vmatprep.mubr.f32.mxu0 0.0
      %899 = vmatmul.mubr.f32.gmra.mxu0 %v811
      %v900 = vpop.f32.mrf.mxu0
      %v901 = vadd.f32 %v772, %v900
      %v902 = vpop.f32.mrf.mxu0
      %v903 = vadd.f32 %v772, %v902
      %904 = vmatprep.mubr.f32.mxu0 0.0
      %905 = vmatmul.mubr.f32.gmra.mxu0 %v814
      %v906 = vpop.f32.mrf.mxu0
      %v907 = vadd.f32 %v777, %v906
      %v908 = vpop.f32.mrf.mxu0
      %v909 = vadd.f32 %v777, %v908
      %910 = vmatprep.mubr.f32.mxu0 0.0
      %911 = vmatmul.mubr.f32.gmra.mxu0 %v817
      %v912 = vpop.f32.mrf.mxu0
      %v913 = vadd.f32 %v782, %v912
      %v914 = vpop.f32.mrf.mxu0
      %v915 = vadd.f32 %v782, %v914
      %916 = vmatprep.mubr.f32.mxu0 0.0
      %917 = vmatmul.mubr.f32.gmra.mxu0 %v820
      %v918 = vpop.f32.mrf.mxu0
      %v919 = vadd.f32 %v787, %v918
      %v920 = vpop.f32.mrf.mxu0
      %v921 = vadd.f32 %v787, %v920
      %922 = vmatprep.mubr.f32.mxu0 0.0
      %923 = vmatmul.mubr.f32.gmra.mxu0 %v823
      %v924 = vpop.f32.mrf.mxu0
      %v925 = vadd.f32 %v792, %v924
      %v926 = vpop.f32.mrf.mxu0
      %v927 = vadd.f32 %v792, %v926
      %928 = vmatprep.mubr.f32.mxu0 0.0
      %929 = vmatmul.mubr.f32.gmra.mxu0 %v826
      %v930 = vpop.f32.mrf.mxu0
      %v931 = vadd.f32 %v797, %v930
      %v932 = vpop.f32.mrf.mxu0
      %v933 = vadd.f32 %v797, %v932
      %934 = vmatprep.mubr.f32.mxu0 0.0
      %935 = vmatmul.mubr.f32.gmra.mxu0 %v829
      %v936 = vpop.f32.mrf.mxu0
      %v937 = vadd.f32 %v802, %v936
      %v938 = vpop.f32.mrf.mxu0
      %v939 = vadd.f32 %v802, %v938
      %940 = vmatprep.mubr.f32.mxu0 0.0
      %941 = vmatmul.mubr.f32.gmra.mxu0 %v832
      %v942 = vpop.f32.mrf.mxu0
      %v943 = vadd.f32 %v807, %v942
      %v944 = vpop.f32.mrf.mxu0
      %v945 = vadd.f32 %v807, %v944
      %946 = vdwg.mxu0
      %947 = vmatprep.subr.mxu0 0.0
      %948 = vmatpush1.msra.mxu0 0.0
      %949 = vmatprep.subr.mxu0 0.0
      %950 = vmatpush1.msra.mxu0 0.0
      %951 = vmatprep.subr.mxu0 0.0
      %952 = vmatpush1.msra.mxu0 0.0
      %953 = vmatprep.subr.mxu0 0.0
      %954 = vmatpush1.msra.mxu0 0.0
      %955 = vmatprep.subr.mxu0 0.0
      %956 = vmatpush1.msra.mxu0 0.0
      %957 = vmatprep.subr.mxu0 0.0
      %958 = vmatpush1.msra.mxu0 0.0
      %959 = vmatprep.subr.mxu0 0.0
      %960 = vmatpush1.msra.mxu0 0.0
      %961 = vmatprep.subr.mxu0 0.0
      %962 = vmatpush1.msra.mxu0 0.0
      %963 = vmatprep.subr.mxu0 %v751
      %964 = vmatpush1.msra.mxu0 %v750
      %965 = vmatprep.subr.mxu0 %v746
      %966 = vmatpush1.msra.mxu0 %v745
      %967 = vmatprep.subr.mxu0 %v741
      %968 = vmatpush1.msra.mxu0 %v740
      %969 = vmatprep.subr.mxu0 %v736
      %970 = vmatpush1.msra.mxu0 %v735
      %971 = vmatprep.subr.mxu0 %v731
      %972 = vmatpush1.msra.mxu0 %v730
      %973 = vmatprep.subr.mxu0 %v726
      %974 = vmatpush1.msra.mxu0 %v725
      %975 = vmatprep.subr.mxu0 %v721
      %976 = vmatpush1.msra.mxu0 %v720
      %977 = vmatprep.subr.mxu0 %v716
      %978 = vmatpush1.msra.mxu0 %v715
      %979 = vmatprep.subr.mxu0 0.0
      %980 = vmatpush2.msra.mxu0 0.0
      %981 = vmatprep.subr.mxu0 0.0
      %982 = vmatpush2.msra.mxu0 0.0
      %983 = vmatprep.subr.mxu0 0.0
      %984 = vmatpush2.msra.mxu0 0.0
      %985 = vmatprep.subr.mxu0 0.0
      %986 = vmatpush2.msra.mxu0 0.0
      %987 = vmatprep.subr.mxu0 0.0
      %988 = vmatpush2.msra.mxu0 0.0
      %989 = vmatprep.subr.mxu0 0.0
      %990 = vmatpush2.msra.mxu0 0.0
      %991 = vmatprep.subr.mxu0 0.0
      %992 = vmatpush2.msra.mxu0 0.0
      %993 = vmatprep.subr.mxu0 0.0
      %994 = vmatpush2.msra.mxu0 0.0
      %995 = vmatprep.subr.mxu0 0.0
      %996 = vmatpush2.msra.mxu0 0.0
      %997 = vmatprep.subr.mxu0 0.0
      %998 = vmatpush2.msra.mxu0 0.0
      %999 = vmatprep.subr.mxu0 0.0
      %1000 = vmatpush2.msra.mxu0 0.0
      %1001 = vmatprep.subr.mxu0 0.0
      %1002 = vmatpush2.msra.mxu0 0.0
      %1003 = vmatprep.subr.mxu0 0.0
      %1004 = vmatpush2.msra.mxu0 0.0
      %1005 = vmatprep.subr.mxu0 0.0
      %1006 = vmatpush2.msra.mxu0 0.0
      %1007 = vmatprep.subr.mxu0 0.0
      %1008 = vmatpush2.msra.mxu0 0.0
      %1009 = vmatprep.subr.mxu0 0.0
      %1010 = vmatpush2.msra.mxu0 0.0
      %1011 = vmatprep.mubr.f32.mxu0 0.0
      %1012 = vmatmul.mubr.f32.gmra.mxu0 %v811
      %v1013 = vpop.f32.mrf.mxu0
      %v1014 = vadd.f32 %v772, %v1013
      %v1015 = vpop.f32.mrf.mxu0
      %v1016 = vadd.f32 %v772, %v1015
      %1017 = vmatprep.mubr.f32.mxu0 0.0
      %1018 = vmatmul.mubr.f32.gmra.mxu0 %v814
      %v1019 = vpop.f32.mrf.mxu0
      %v1020 = vadd.f32 %v777, %v1019
      %v1021 = vpop.f32.mrf.mxu0
      %v1022 = vadd.f32 %v777, %v1021
      %1023 = vmatprep.mubr.f32.mxu0 0.0
      %1024 = vmatmul.mubr.f32.gmra.mxu0 %v817
      %v1025 = vpop.f32.mrf.mxu0
      %v1026 = vadd.f32 %v782, %v1025
      %v1027 = vpop.f32.mrf.mxu0
      %v1028 = vadd.f32 %v782, %v1027
      %1029 = vmatprep.mubr.f32.mxu0 0.0
      %1030 = vmatmul.mubr.f32.gmra.mxu0 %v820
      %v1031 = vpop.f32.mrf.mxu0
      %v1032 = vadd.f32 %v787, %v1031
      %v1033 = vpop.f32.mrf.mxu0
      %v1034 = vadd.f32 %v787, %v1033
      %1035 = vmatprep.mubr.f32.mxu0 0.0
      %1036 = vmatmul.mubr.f32.gmra.mxu0 %v823
      %v1037 = vpop.f32.mrf.mxu0
      %v1038 = vadd.f32 %v792, %v1037
      %v1039 = vpop.f32.mrf.mxu0
      %v1040 = vadd.f32 %v792, %v1039
      %1041 = vmatprep.mubr.f32.mxu0 0.0
      %1042 = vmatmul.mubr.f32.gmra.mxu0 %v826
      %v1043 = vpop.f32.mrf.mxu0
      %v1044 = vadd.f32 %v797, %v1043
      %v1045 = vpop.f32.mrf.mxu0
      %v1046 = vadd.f32 %v797, %v1045
      %1047 = vmatprep.mubr.f32.mxu0 0.0
      %1048 = vmatmul.mubr.f32.gmra.mxu0 %v829
      %v1049 = vpop.f32.mrf.mxu0
      %v1050 = vadd.f32 %v802, %v1049
      %v1051 = vpop.f32.mrf.mxu0
      %v1052 = vadd.f32 %v802, %v1051
      %1053 = vmatprep.mubr.f32.mxu0 0.0
      %1054 = vmatmul.mubr.f32.gmra.mxu0 %v832
      %v1055 = vpop.f32.mrf.mxu0
      %v1056 = vadd.f32 %v807, %v1055
      %v1057 = vpop.f32.mrf.mxu0
      %v1058 = vadd.f32 %v807, %v1057
      %1059 = vdwg.mxu0
      %1060 = vmatprep.subr.mxu0 0.0
      %1061 = vmatpush1.msra.mxu0 0.0
      %1062 = vmatprep.subr.mxu0 0.0
      %1063 = vmatpush1.msra.mxu0 0.0
      %1064 = vmatprep.subr.mxu0 0.0
      %1065 = vmatpush1.msra.mxu0 0.0
      %1066 = vmatprep.subr.mxu0 0.0
      %1067 = vmatpush1.msra.mxu0 0.0
      %1068 = vmatprep.subr.mxu0 0.0
      %1069 = vmatpush1.msra.mxu0 0.0
      %1070 = vmatprep.subr.mxu0 0.0
      %1071 = vmatpush1.msra.mxu0 0.0
      %1072 = vmatprep.subr.mxu0 0.0
      %1073 = vmatpush1.msra.mxu0 0.0
      %1074 = vmatprep.subr.mxu0 0.0
      %1075 = vmatpush1.msra.mxu0 0.0
      %1076 = vmatprep.subr.mxu0 0.0
      %1077 = vmatpush1.msra.mxu0 %v752
      %1078 = vmatprep.subr.mxu0 0.0
      %1079 = vmatpush1.msra.mxu0 %v747
      %1080 = vmatprep.subr.mxu0 0.0
      %1081 = vmatpush1.msra.mxu0 %v742
      %1082 = vmatprep.subr.mxu0 0.0
      %1083 = vmatpush1.msra.mxu0 %v737
      %1084 = vmatprep.subr.mxu0 0.0
      %1085 = vmatpush1.msra.mxu0 %v732
      %1086 = vmatprep.subr.mxu0 0.0
      %1087 = vmatpush1.msra.mxu0 %v727
      %1088 = vmatprep.subr.mxu0 0.0
      %1089 = vmatpush1.msra.mxu0 %v722
      %1090 = vmatprep.subr.mxu0 0.0
      %1091 = vmatpush1.msra.mxu0 %v717
      %1092 = vmatprep.subr.mxu0 0.0
      %1093 = vmatpush2.msra.mxu0 0.0
      %1094 = vmatprep.subr.mxu0 0.0
      %1095 = vmatpush2.msra.mxu0 0.0
      %1096 = vmatprep.subr.mxu0 0.0
      %1097 = vmatpush2.msra.mxu0 0.0
      %1098 = vmatprep.subr.mxu0 0.0
      %1099 = vmatpush2.msra.mxu0 0.0
      %1100 = vmatprep.subr.mxu0 0.0
      %1101 = vmatpush2.msra.mxu0 0.0
      %1102 = vmatprep.subr.mxu0 0.0
      %1103 = vmatpush2.msra.mxu0 0.0
      %1104 = vmatprep.subr.mxu0 0.0
      %1105 = vmatpush2.msra.mxu0 0.0
      %1106 = vmatprep.subr.mxu0 0.0
      %1107 = vmatpush2.msra.mxu0 0.0
      %1108 = vmatprep.subr.mxu0 0.0
      %1109 = vmatpush2.msra.mxu0 0.0
      %1110 = vmatprep.subr.mxu0 0.0
      %1111 = vmatpush2.msra.mxu0 0.0
      %1112 = vmatprep.subr.mxu0 0.0
      %1113 = vmatpush2.msra.mxu0 0.0
      %1114 = vmatprep.subr.mxu0 0.0
      %1115 = vmatpush2.msra.mxu0 0.0
      %1116 = vmatprep.subr.mxu0 0.0
      %1117 = vmatpush2.msra.mxu0 0.0
      %1118 = vmatprep.subr.mxu0 0.0
      %1119 = vmatpush2.msra.mxu0 0.0
      %1120 = vmatprep.subr.mxu0 0.0
      %1121 = vmatpush2.msra.mxu0 0.0
      %1122 = vmatprep.subr.mxu0 0.0
      %1123 = vmatpush2.msra.mxu0 0.0
      %1124 = vmatprep.mubr.f32.mxu0 0.0
      %1125 = vmatmul.mubr.f32.gmra.mxu0 %v811
      %v1126 = vpop.f32.mrf.mxu0
      %v1127 = vadd.f32 %v772, %v1126
      %v1128 = vpop.f32.mrf.mxu0
      %1129 = vmatprep.mubr.f32.mxu0 0.0
      %1130 = vmatmul.mubr.f32.gmra.mxu0 %v814
      %v1131 = vpop.f32.mrf.mxu0
      %v1132 = vadd.f32 %v777, %v1131
      %v1133 = vpop.f32.mrf.mxu0
      %1134 = vmatprep.mubr.f32.mxu0 0.0
      %1135 = vmatmul.mubr.f32.gmra.mxu0 %v817
      %v1136 = vpop.f32.mrf.mxu0
      %v1137 = vadd.f32 %v782, %v1136
      %v1138 = vpop.f32.mrf.mxu0
      %1139 = vmatprep.mubr.f32.mxu0 0.0
      %1140 = vmatmul.mubr.f32.gmra.mxu0 %v820
      %v1141 = vpop.f32.mrf.mxu0
      %v1142 = vadd.f32 %v787, %v1141
      %v1143 = vpop.f32.mrf.mxu0
      %1144 = vmatprep.mubr.f32.mxu0 0.0
      %1145 = vmatmul.mubr.f32.gmra.mxu0 %v823
      %v1146 = vpop.f32.mrf.mxu0
      %v1147 = vadd.f32 %v792, %v1146
      %v1148 = vpop.f32.mrf.mxu0
      %1149 = vmatprep.mubr.f32.mxu0 0.0
      %1150 = vmatmul.mubr.f32.gmra.mxu0 %v826
      %v1151 = vpop.f32.mrf.mxu0
      %v1152 = vadd.f32 %v797, %v1151
      %v1153 = vpop.f32.mrf.mxu0
      %1154 = vmatprep.mubr.f32.mxu0 0.0
      %1155 = vmatmul.mubr.f32.gmra.mxu0 %v829
      %v1156 = vpop.f32.mrf.mxu0
      %v1157 = vadd.f32 %v802, %v1156
      %v1158 = vpop.f32.mrf.mxu0
      %1159 = vmatprep.mubr.f32.mxu0 0.0
      %1160 = vmatmul.mubr.f32.gmra.mxu0 %v832
      %v1161 = vpop.f32.mrf.mxu0
      %v1162 = vadd.f32 %v807, %v1161
      %v1163 = vpop.f32.mrf.mxu0
      %1164 = vdwg.mxu0
      %v1165 = vmax.f32 %v901, 0.0
      %v1166 = vmax.f32 %v903, 0.0
      %v1167 = vmax.f32 %v1014, 0.0
      %v1168 = vmax.f32 %v1016, 0.0
      %v1169 = vmax.f32 %v1127, 0.0
      %v1170 = vmax.f32 %v907, 0.0
      %v1171 = vmax.f32 %v909, 0.0
      %v1172 = vmax.f32 %v1020, 0.0
      %v1173 = vmax.f32 %v1022, 0.0
      %v1174 = vmax.f32 %v1132, 0.0
      %v1175 = vmax.f32 %v913, 0.0
      %v1176 = vmax.f32 %v915, 0.0
      %v1177 = vmax.f32 %v1026, 0.0
      %v1178 = vmax.f32 %v1028, 0.0
      %v1179 = vmax.f32 %v1137, 0.0
      %v1180 = vmax.f32 %v919, 0.0
      %v1181 = vmax.f32 %v921, 0.0
      %v1182 = vmax.f32 %v1032, 0.0
      %v1183 = vmax.f32 %v1034, 0.0
      %v1184 = vmax.f32 %v1142, 0.0
      %v1185 = vmax.f32 %v925, 0.0
      %v1186 = vmax.f32 %v927, 0.0
      %v1187 = vmax.f32 %v1038, 0.0
      %v1188 = vmax.f32 %v1040, 0.0
      %v1189 = vmax.f32 %v1147, 0.0
      %v1190 = vmax.f32 %v931, 0.0
      %v1191 = vmax.f32 %v933, 0.0
      %v1192 = vmax.f32 %v1044, 0.0
      %v1193 = vmax.f32 %v1046, 0.0
      %v1194 = vmax.f32 %v1152, 0.0
      %v1195 = vmax.f32 %v937, 0.0
      %v1196 = vmax.f32 %v939, 0.0
      %v1197 = vmax.f32 %v1050, 0.0
      %v1198 = vmax.f32 %v1052, 0.0
      %v1199 = vmax.f32 %v1157, 0.0
      %v1200 = vmax.f32 %v943, 0.0
      %v1201 = vmax.f32 %v945, 0.0
      %v1202 = vmax.f32 %v1056, 0.0
      %v1203 = vmax.f32 %v1058, 0.0
      %v1204 = vmax.f32 %v1162, 0.0
      %v1205 = vld [vmem:[%s5] sm:$0x3]
      %v1206 = vld [vmem:[%s6] sm:$0x3]
      %1208 = vset.pattern.permute.xlu0 0
      %1209 = vperm.xlu0 %1208, %v1206
      %v1210 = vpop.permute.xlu0 %1209
      %v1213 = vsel %vm809, %v1205, 0
      %1215 = vmatprep.subr.mxu0 0.0
      %1216 = vmatpush1.msra.mxu0 0.0
      %1217 = vmatprep.subr.mxu0 0.0
      %1218 = vmatpush1.msra.mxu0 0.0
      %1219 = vmatprep.subr.mxu0 0.0
      %1220 = vmatpush1.msra.mxu0 0.0
      %1221 = vmatprep.subr.mxu0 0.0
      %1222 = vmatpush1.msra.mxu0 0.0
      %1223 = vmatprep.subr.mxu0 0.0
      %1224 = vmatpush1.msra.mxu0 0.0
      %1225 = vmatprep.subr.mxu0 0.0
      %1226 = vmatpush1.msra.mxu0 0.0
      %1227 = vmatprep.subr.mxu0 0.0
      %1228 = vmatpush1.msra.mxu0 0.0
      %1229 = vmatprep.subr.mxu0 0.0
      %1230 = vmatpush1.msra.mxu0 0.0
      %1231 = vmatprep.subr.mxu0 %v1201
      %1232 = vmatpush1.msra.mxu0 %v1200
      %1233 = vmatprep.subr.mxu0 %v1196
      %1234 = vmatpush1.msra.mxu0 %v1195
      %1235 = vmatprep.subr.mxu0 %v1191
      %1236 = vmatpush1.msra.mxu0 %v1190
      %1237 = vmatprep.subr.mxu0 %v1186
      %1238 = vmatpush1.msra.mxu0 %v1185
      %1239 = vmatprep.subr.mxu0 %v1181
      %1240 = vmatpush1.msra.mxu0 %v1180
      %1241 = vmatprep.subr.mxu0 %v1176
      %1242 = vmatpush1.msra.mxu0 %v1175
      %1243 = vmatprep.subr.mxu0 %v1171
      %1244 = vmatpush1.msra.mxu0 %v1170
      %1245 = vmatprep.subr.mxu0 %v1166
      %1246 = vmatpush1.msra.mxu0 %v1165
      %1247 = vmatprep.subr.mxu0 0.0
      %1248 = vmatpush2.msra.mxu0 0.0
      %1249 = vmatprep.subr.mxu0 0.0
      %1250 = vmatpush2.msra.mxu0 0.0
      %1251 = vmatprep.subr.mxu0 0.0
      %1252 = vmatpush2.msra.mxu0 0.0
      %1253 = vmatprep.subr.mxu0 0.0
      %1254 = vmatpush2.msra.mxu0 0.0
      %1255 = vmatprep.subr.mxu0 0.0
      %1256 = vmatpush2.msra.mxu0 0.0
      %1257 = vmatprep.subr.mxu0 0.0
      %1258 = vmatpush2.msra.mxu0 0.0
      %1259 = vmatprep.subr.mxu0 0.0
      %1260 = vmatpush2.msra.mxu0 0.0
      %1261 = vmatprep.subr.mxu0 0.0
      %1262 = vmatpush2.msra.mxu0 0.0
      %1263 = vmatprep.subr.mxu0 0.0
      %1264 = vmatpush2.msra.mxu0 0.0
      %1265 = vmatprep.subr.mxu0 0.0
      %1266 = vmatpush2.msra.mxu0 0.0
      %1267 = vmatprep.subr.mxu0 0.0
      %1268 = vmatpush2.msra.mxu0 0.0
      %1269 = vmatprep.subr.mxu0 0.0
      %1270 = vmatpush2.msra.mxu0 0.0
      %1271 = vmatprep.subr.mxu0 0.0
      %1272 = vmatpush2.msra.mxu0 0.0
      %1273 = vmatprep.subr.mxu0 0.0
      %1274 = vmatpush2.msra.mxu0 0.0
      %1275 = vmatprep.subr.mxu0 0.0
      %1276 = vmatpush2.msra.mxu0 0.0
      %1277 = vmatprep.subr.mxu0 0.0
      %1278 = vmatpush2.msra.mxu0 0.0
      %1279 = vmatprep.mubr.f32.mxu0 0.0
      %1280 = vmatmul.mubr.f32.gmra.mxu0 %v1213
      %v1281 = vpop.f32.mrf.mxu0
      %v1282 = vadd.f32 %v1210, %v1281
      %v1283 = vpop.f32.mrf.mxu0
      %v1284 = vadd.f32 %v1210, %v1283
      %1285 = vdwg.mxu0
      %1286 = vmatprep.subr.mxu0 0.0
      %1287 = vmatpush1.msra.mxu0 0.0
      %1288 = vmatprep.subr.mxu0 0.0
      %1289 = vmatpush1.msra.mxu0 0.0
      %1290 = vmatprep.subr.mxu0 0.0
      %1291 = vmatpush1.msra.mxu0 0.0
      %1292 = vmatprep.subr.mxu0 0.0
      %1293 = vmatpush1.msra.mxu0 0.0
      %1294 = vmatprep.subr.mxu0 0.0
      %1295 = vmatpush1.msra.mxu0 0.0
      %1296 = vmatprep.subr.mxu0 0.0
      %1297 = vmatpush1.msra.mxu0 0.0
      %1298 = vmatprep.subr.mxu0 0.0
      %1299 = vmatpush1.msra.mxu0 0.0
      %1300 = vmatprep.subr.mxu0 0.0
      %1301 = vmatpush1.msra.mxu0 0.0
      %1302 = vmatprep.subr.mxu0 %v1203
      %1303 = vmatpush1.msra.mxu0 %v1202
      %1304 = vmatprep.subr.mxu0 %v1198
      %1305 = vmatpush1.msra.mxu0 %v1197
      %1306 = vmatprep.subr.mxu0 %v1193
      %1307 = vmatpush1.msra.mxu0 %v1192
      %1308 = vmatprep.subr.mxu0 %v1188
      %1309 = vmatpush1.msra.mxu0 %v1187
      %1310 = vmatprep.subr.mxu0 %v1183
      %1311 = vmatpush1.msra.mxu0 %v1182
      %1312 = vmatprep.subr.mxu0 %v1178
      %1313 = vmatpush1.msra.mxu0 %v1177
      %1314 = vmatprep.subr.mxu0 %v1173
      %1315 = vmatpush1.msra.mxu0 %v1172
      %1316 = vmatprep.subr.mxu0 %v1168
      %1317 = vmatpush1.msra.mxu0 %v1167
      %1318 = vmatprep.subr.mxu0 0.0
      %1319 = vmatpush2.msra.mxu0 0.0
      %1320 = vmatprep.subr.mxu0 0.0
      %1321 = vmatpush2.msra.mxu0 0.0
      %1322 = vmatprep.subr.mxu0 0.0
      %1323 = vmatpush2.msra.mxu0 0.0
      %1324 = vmatprep.subr.mxu0 0.0
      %1325 = vmatpush2.msra.mxu0 0.0
      %1326 = vmatprep.subr.mxu0 0.0
      %1327 = vmatpush2.msra.mxu0 0.0
      %1328 = vmatprep.subr.mxu0 0.0
      %1329 = vmatpush2.msra.mxu0 0.0
      %1330 = vmatprep.subr.mxu0 0.0
      %1331 = vmatpush2.msra.mxu0 0.0
      %1332 = vmatprep.subr.mxu0 0.0
      %1333 = vmatpush2.msra.mxu0 0.0
      %1334 = vmatprep.subr.mxu0 0.0
      %1335 = vmatpush2.msra.mxu0 0.0
      %1336 = vmatprep.subr.mxu0 0.0
      %1337 = vmatpush2.msra.mxu0 0.0
      %1338 = vmatprep.subr.mxu0 0.0
      %1339 = vmatpush2.msra.mxu0 0.0
      %1340 = vmatprep.subr.mxu0 0.0
      %1341 = vmatpush2.msra.mxu0 0.0
      %1342 = vmatprep.subr.mxu0 0.0
      %1343 = vmatpush2.msra.mxu0 0.0
      %1344 = vmatprep.subr.mxu0 0.0
      %1345 = vmatpush2.msra.mxu0 0.0
      %1346 = vmatprep.subr.mxu0 0.0
      %1347 = vmatpush2.msra.mxu0 0.0
      %1348 = vmatprep.subr.mxu0 0.0
      %1349 = vmatpush2.msra.mxu0 0.0
      %1350 = vmatprep.mubr.f32.mxu0 0.0
      %1351 = vmatmul.mubr.f32.gmra.mxu0 %v1213
      %v1352 = vpop.f32.mrf.mxu0
      %v1353 = vadd.f32 %v1210, %v1352
      %v1354 = vpop.f32.mrf.mxu0
      %v1355 = vadd.f32 %v1210, %v1354
      %1356 = vdwg.mxu0
      %1357 = vmatprep.subr.mxu0 0.0
      %1358 = vmatpush1.msra.mxu0 0.0
      %1359 = vmatprep.subr.mxu0 0.0
      %1360 = vmatpush1.msra.mxu0 0.0
      %1361 = vmatprep.subr.mxu0 0.0
      %1362 = vmatpush1.msra.mxu0 0.0
      %1363 = vmatprep.subr.mxu0 0.0
      %1364 = vmatpush1.msra.mxu0 0.0
      %1365 = vmatprep.subr.mxu0 0.0
      %1366 = vmatpush1.msra.mxu0 0.0
      %1367 = vmatprep.subr.mxu0 0.0
      %1368 = vmatpush1.msra.mxu0 0.0
      %1369 = vmatprep.subr.mxu0 0.0
      %1370 = vmatpush1.msra.mxu0 0.0
      %1371 = vmatprep.subr.mxu0 0.0
      %1372 = vmatpush1.msra.mxu0 0.0
      %1373 = vmatprep.subr.mxu0 0.0
      %1374 = vmatpush1.msra.mxu0 %v1204
      %1375 = vmatprep.subr.mxu0 0.0
      %1376 = vmatpush1.msra.mxu0 %v1199
      %1377 = vmatprep.subr.mxu0 0.0
      %1378 = vmatpush1.msra.mxu0 %v1194
      %1379 = vmatprep.subr.mxu0 0.0
      %1380 = vmatpush1.msra.mxu0 %v1189
      %1381 = vmatprep.subr.mxu0 0.0
      %1382 = vmatpush1.msra.mxu0 %v1184
      %1383 = vmatprep.subr.mxu0 0.0
      %1384 = vmatpush1.msra.mxu0 %v1179
      %1385 = vmatprep.subr.mxu0 0.0
      %1386 = vmatpush1.msra.mxu0 %v1174
      %1387 = vmatprep.subr.mxu0 0.0
      %1388 = vmatpush1.msra.mxu0 %v1169
      %1389 = vmatprep.subr.mxu0 0.0
      %1390 = vmatpush2.msra.mxu0 0.0
      %1391 = vmatprep.subr.mxu0 0.0
      %1392 = vmatpush2.msra.mxu0 0.0
      %1393 = vmatprep.subr.mxu0 0.0
      %1394 = vmatpush2.msra.mxu0 0.0
      %1395 = vmatprep.subr.mxu0 0.0
      %1396 = vmatpush2.msra.mxu0 0.0
      %1397 = vmatprep.subr.mxu0 0.0
      %1398 = vmatpush2.msra.mxu0 0.0
      %1399 = vmatprep.subr.mxu0 0.0
      %1400 = vmatpush2.msra.mxu0 0.0
      %1401 = vmatprep.subr.mxu0 0.0
      %1402 = vmatpush2.msra.mxu0 0.0
      %1403 = vmatprep.subr.mxu0 0.0
      %1404 = vmatpush2.msra.mxu0 0.0
      %1405 = vmatprep.subr.mxu0 0.0
      %1406 = vmatpush2.msra.mxu0 0.0
      %1407 = vmatprep.subr.mxu0 0.0
      %1408 = vmatpush2.msra.mxu0 0.0
      %1409 = vmatprep.subr.mxu0 0.0
      %1410 = vmatpush2.msra.mxu0 0.0
      %1411 = vmatprep.subr.mxu0 0.0
      %1412 = vmatpush2.msra.mxu0 0.0
      %1413 = vmatprep.subr.mxu0 0.0
      %1414 = vmatpush2.msra.mxu0 0.0
      %1415 = vmatprep.subr.mxu0 0.0
      %1416 = vmatpush2.msra.mxu0 0.0
      %1417 = vmatprep.subr.mxu0 0.0
      %1418 = vmatpush2.msra.mxu0 0.0
      %1419 = vmatprep.subr.mxu0 0.0
      %1420 = vmatpush2.msra.mxu0 0.0
      %1421 = vmatprep.mubr.f32.mxu0 0.0
      %1422 = vmatmul.mubr.f32.gmra.mxu0 %v1213
      %v1423 = vpop.f32.mrf.mxu0
      %v1424 = vadd.f32 %v1210, %v1423
      %v1425 = vpop.f32.mrf.mxu0
      %1426 = vdwg.mxu0
      %v1432 = vrot.slane %v1282, 7
      %v1433 = vrot.slane %v1284, 7
      %v1434 = vrot.slane %v1353, 7
      %v1435 = vrot.slane %v1355, 7
      %v1436 = vrot.slane %v1424, 7
      %v1442 = vsub.f32 %v1282, %v1432
      %v1443 = vsub.f32 %v1284, %v1433
      %v1444 = vsub.f32 %v1353, %v1434
      %v1445 = vsub.f32 %v1355, %v1435
      %v1446 = vsub.f32 %v1424, %v1436
      %v1447 = vmul.f32 %v1442, 0.5
      %v1448 = vmul.f32 %v1443, 0.5
      %v1449 = vmul.f32 %v1444, 0.5
      %v1450 = vmul.f32 %v1445, 0.5
      %v1451 = vmul.f32 %v1446, 0.5
      %v1452 = vtanh.pop %v1447
      %v1453 = vtanh.pop %v1448
      %v1454 = vtanh.pop %v1449
      %v1455 = vtanh.pop %v1450
      %v1456 = vtanh.pop %v1451
      %v1457 = vadd.f32 %v1452, 1.0
      %v1458 = vadd.f32 %v1453, 1.0
      %v1459 = vadd.f32 %v1454, 1.0
      %v1460 = vadd.f32 %v1455, 1.0
      %v1461 = vadd.f32 %v1456, 1.0
      %v1462 = vmul.f32 %v1457, 0.5
      %v1463 = vmul.f32 %v1458, 0.5
      %v1464 = vmul.f32 %v1459, 0.5
      %v1465 = vmul.f32 %v1460, 0.5
      %v1466 = vmul.f32 %v1461, 0.5
      %v1467 = vsub.f32 1.0, %v1462
      %v1468 = vsub.f32 1.0, %v1463
      %v1469 = vsub.f32 1.0, %v1464
      %v1470 = vsub.f32 1.0, %v1465
      %v1471 = vsub.f32 1.0, %v1466
      %v1477 = vrot.slane %v1467, 1
      %v1478 = vrot.slane %v1468, 1
      %v1479 = vrot.slane %v1469, 1
      %v1480 = vrot.slane %v1470, 1
      %v1481 = vrot.slane %v1471, 1
      %vm1487 = vcmask 1040384
      %v1488 = vsel %vm1487, %v1477, %v1462
      %v1489 = vsel %vm1487, %v1478, %v1463
      %v1490 = vsel %vm1487, %v1479, %v1464
      %v1491 = vsel %vm1487, %v1480, %v1465
      %v1492 = vsel %vm1487, %v1481, %v1466
      %v1498 = vcombine.low %v1488, %v1489
      %v1499 = vcombine.low %v1490, %v1491
      %v1501 = vunpack.c.l.s4 1983009808
      %v1502 = vunpack.c.0.s8 %v1501
      %v1503 = vlaneseq
      %v1504 = vshrl.u32 %v1503, 7
      %v1505 = vsub.s32 %v1502, %v1504
      %v1506 = vrot.slane %v1498, %v1505
      %v1508 = vunpack.c.l.s4 1983009808
      %v1509 = vunpack.c.0.s8 %v1508
      %v1510 = vlaneseq
      %v1511 = vshrl.u32 %v1510, 7
      %v1512 = vsub.s32 %v1509, %v1511
      %v1513 = vrot.slane %v1499, %v1512
      %v1514 = vcombine.low %v1506, %v1513
      %v1516 = vunpack.c.l.s4 1983009808
      %v1517 = vunpack.c.0.s8 %v1516
      %v1518 = vlaneseq
      %v1519 = vshrl.u32 %v1518, 7
      %v1520 = vsub.s32 %v1517, %v1519
      %v1521 = vrot.slane %v1492, %v1520
      %1524 = vst [vmem:[%s280] sm:$0xff] %v1514
      %1525 = vst [vmem:[%s280 + $0x8] sm:$0x3] %v1521
      %s1526 = smul.u32 5, %s18
      %p1527 = scmp.lt.s32.totalorder %s1526, 9
      %s1528 = scalar_select %p1527, %s1526, 9
      %s1529 = smul.addr %s1528, 2
      %s1530 = scalar_lea.vmem %s7, %s1529
      // Predicated region
      $region49: #{net_forward.1} parent=47 // pred_check
        %p1531 = pneg %p188
      $region50: #{net_forward.1} parent=47 // pred_check_branch
        %1533 = sbr.rel (%p1531) target = $region52
      $region51: #{net_forward.1} parent=47 // pred_region
        %s1534 = smul.u32 5, %s18
      $region52: #{net_forward.1} parent=47 // pred_fallthru
        _
    $region48: #{net_forward.1} parent=5 // pred_fallthru
      _
    %p1535 = scmp.le.s32.totalorder 2, %s13
    // Predicated region
    $region53: #{net_forward.1} parent=5 // pred_check
      %p1536 = pneg %p1535
    $region54: #{net_forward.1} parent=5 // pred_check_branch
      %1538 = sbr.rel (%p1536) target = $region56
    $region55: #{net_forward.1} parent=5 // pred_region
      %s1539 = ssub.s32 %s13, 2
      // Predicated region
      $region57: #{net_forward.1} parent=55 // pred_check
        %p1540 = pneg %p194
      $region58: #{net_forward.1} parent=55 // pred_check_branch
        %1542 = sbr.rel (%p1540) target = $region60
      $region59: #{net_forward.1} parent=55 // pred_region
        %s1543 = smul.u32 5, %s19
        %p1544 = scmp.lt.s32.totalorder %s1543, 9
        %s1545 = scalar_select %p1544, %s1543, 9
        %s1546 = smul.addr %s1545, 2
        %s1547 = scalar_lea.vmem %s7, %s1546
      $region60: #{net_forward.1} parent=55 // pred_fallthru
        _
    $region56: #{net_forward.1} parent=5 // pred_fallthru
      _
  $region6: #{net_forward.1} parent=0 // loop_footer
    %s17 = sadd.s32 1, %s13
  $region7: #{net_forward.1} parent=0 // loop_footer_branch
    %12 = sbr.rel target = $region3
  $region8: #{net_forward.1} parent=0 // loop_exit
    _

</llo_original>
